<compile_context>
chip_gen: v7x
topology: tpu7x:2x2x1
jax: 0.10.0
libtpu: 0.0.40
codegen_flags: <defaults>
</compile_context>

<pallas_src>
import functools
import math

import jax
import jax.numpy as jnp
import numpy as np
from jax.experimental import pallas as pl
from jax.experimental.pallas import tpu as pltpu

N_HEAD = 4  # config.n_head


def _layernorm_f32(h, w, b, eps=1e-5):
    mu = jnp.mean(h, axis=-1, keepdims=True)
    var = jnp.mean(jnp.square(h - mu), axis=-1, keepdims=True)
    return (h - mu) * jax.lax.rsqrt(var + eps) * w + b


def _gelu_tanh(a):
    c = 0.7978845608028654  # sqrt(2/pi)
    return 0.5 * a * (1.0 + jnp.tanh(c * (a + 0.044715 * a * a * a)))


def block_kernel(x_ref,
                 ln1w_ref, ln1b_ref,
                 wq_ref, bq_ref, wk_ref, bk_ref, wv_ref, bv_ref,
                 wproj_ref, bproj_ref,
                 ln2w_ref, ln2b_ref,
                 wfc_ref, bfc_ref, wfc2_ref, bfc2_ref,
                 out_ref, *, n_head):
    f32 = jnp.float32
    cdt = wq_ref.dtype                       # bfloat16 MXU operand dtype
    T, C = x_ref.shape[1], x_ref.shape[2]
    hd = C // n_head

    x = x_ref[0]                             # (T, C) f32, this batch element

    # ---- attention branch: x + attn(ln_1(x)) ----
    h = _layernorm_f32(x, ln1w_ref[...], ln1b_ref[...])
    hb = h.astype(cdt)
    # 1/sqrt(hd) already folded into wq/bq by the wrapper.  Cast q/k/v to the
    # bf16 compute dtype ONCE here (not per head).
    q = (jnp.dot(hb, wq_ref[...], preferred_element_type=f32)
         + bq_ref[...]).astype(cdt)
    k = (jnp.dot(hb, wk_ref[...], preferred_element_type=f32)
         + bk_ref[...]).astype(cdt)
    v = (jnp.dot(hb, wv_ref[...], preferred_element_type=f32)
         + bv_ref[...]).astype(cdt)

    # Causal additive mask built in-kernel: (T, T), 0 allowed / -1e30 masked.
    ri = jax.lax.broadcasted_iota(jnp.int32, (T, T), 0)
    ci = jax.lax.broadcasted_iota(jnp.int32, (T, T), 1)
    mask_bias = jnp.where(ci <= ri, jnp.float32(0.0), jnp.float32(-1e30))

    ys = []
    for hi in range(n_head):                 # static unroll over heads
        sl = slice(hi * hd, (hi + 1) * hd)
        qh, kh, vh = q[:, sl], k[:, sl], v[:, sl]
        att = jnp.einsum("nd,md->nm", qh, kh,
                         preferred_element_type=f32) + mask_bias
        att = att - jnp.max(att, axis=-1, keepdims=True)
        p = jnp.exp(att)                      # f32 softmax
        p = p * pl.reciprocal(jnp.sum(p, axis=-1, keepdims=True), approx=True)
        ys.append(jnp.dot(p.astype(cdt), vh, preferred_element_type=f32))
    # Reassemble heads along lanes and do ONE K=C projection matmul.
    y = jnp.concatenate(ys, axis=-1).astype(cdt)          # (T, C)
    attn = jnp.dot(y, wproj_ref[...],
                   preferred_element_type=f32) + bproj_ref[...]
    x1 = x + attn

    # ---- MLP branch: x1 + mlp(ln_2(x1)) ----
    h2 = _layernorm_f32(x1, ln2w_ref[...], ln2b_ref[...])
    a = jnp.dot(h2.astype(cdt), wfc_ref[...],
                preferred_element_type=f32) + bfc_ref[...]
    g = _gelu_tanh(a)                         # f32 GELU(tanh)
    m = jnp.dot(g.astype(cdt), wfc2_ref[...],
                preferred_element_type=f32) + bfc2_ref[...]
    out_ref[0] = (x1 + m).astype(out_ref.dtype)


_KPARAM_ORDER = ("ln1_w", "ln1_b", "w_q", "b_q", "w_k", "b_k", "w_v", "b_v",
                 "w_proj", "b_proj", "ln2_w", "ln2_b",
                 "w_fc", "b_fc", "w_fc2", "b_fc2")


def prepare_kernel_params(params, n_head=N_HEAD, compute_dtype=jnp.bfloat16):
    """Split / fold / cast the module parameters into the kernel layout."""
    C = params["w_proj"].shape[0]
    hd = C // n_head
    scale = 1.0 / math.sqrt(hd)
    f32 = jnp.float32

    w_qkv, b_qkv = params["w_qkv"], params["b_qkv"]
    w_q, w_k, w_v = w_qkv[:, :C], w_qkv[:, C:2 * C], w_qkv[:, 2 * C:]
    b_q, b_k, b_v = b_qkv[:C], b_qkv[C:2 * C], b_qkv[2 * C:]

    def row(v):                               # 1-D -> (1, N), float32
        return jnp.asarray(v, f32).reshape(1, -1)

    return {
        "ln1_w": row(params["ln1_w"]), "ln1_b": row(params["ln1_b"]),
        # attention scale folded into the Q projection
        "w_q": (w_q * scale).astype(compute_dtype), "b_q": row(b_q * scale),
        "w_k": w_k.astype(compute_dtype), "b_k": row(b_k),
        "w_v": w_v.astype(compute_dtype), "b_v": row(b_v),
        "w_proj": params["w_proj"].astype(compute_dtype),
        "b_proj": row(params["b_proj"]),
        "ln2_w": row(params["ln2_w"]), "ln2_b": row(params["ln2_b"]),
        "w_fc": params["w_fc"].astype(compute_dtype),
        "b_fc": row(params["b_fc"]),
        "w_fc2": params["w_fc2"].astype(compute_dtype),
        "b_fc2": row(params["b_fc2"]),
    }


def gpt2_block(x, params, n_head=N_HEAD):
    B, T, C = x.shape
    kparams = prepare_kernel_params(params, n_head)

    def const_spec(shape):
        # Weights/biases: same block every grid step -> DMA'd once, stay
        # VMEM-resident across the batch grid.
        return pl.BlockSpec(shape, lambda b: (0, 0))

    in_specs = [
        pl.BlockSpec((1, T, C), lambda b: (b, 0, 0)),   # x (streamed per step)
        const_spec((1, C)), const_spec((1, C)),         # ln1_w, ln1_b
        const_spec((C, C)), const_spec((1, C)),         # w_q, b_q
        const_spec((C, C)), const_spec((1, C)),         # w_k, b_k
        const_spec((C, C)), const_spec((1, C)),         # w_v, b_v
        const_spec((C, C)), const_spec((1, C)),         # w_proj, b_proj
        const_spec((1, C)), const_spec((1, C)),         # ln2_w, ln2_b
        const_spec((C, 4 * C)), const_spec((1, 4 * C)),  # w_fc, b_fc
        const_spec((4 * C, C)), const_spec((1, C)),     # w_fc2, b_fc2
    ]
    out_specs = pl.BlockSpec((1, T, C), lambda b: (b, 0, 0))

    out = pl.pallas_call(
        functools.partial(block_kernel, n_head=n_head),
        out_shape=jax.ShapeDtypeStruct((B, T, C), x.dtype),
        grid=(B,),
        in_specs=in_specs,
        out_specs=out_specs,
        compiler_params=pltpu.CompilerParams(
            dimension_semantics=("parallel",),       # 2 TCs on v7x; no-op v5e/v6e
            vmem_limit_bytes=32 * 1024 * 1024),
    )(x, *[kparams[k] for k in _KPARAM_ORDER])
    return out


def reference_block(x, params, n_head=N_HEAD):
    # Pure-JAX (float32) reference mirroring the PyTorch forward.
    def ln(h, w, b):
        mu = jnp.mean(h, -1, keepdims=True)
        var = jnp.mean((h - mu) ** 2, -1, keepdims=True)
        return (h - mu) / jnp.sqrt(var + 1e-5) * w + b

    B, T, C = x.shape
    hd = C // n_head
    h = ln(x, params["ln1_w"], params["ln1_b"])
    qkv = h @ params["w_qkv"] + params["b_qkv"]
    q, k, v = jnp.split(qkv, 3, axis=-1)
    q = q.reshape(B, T, n_head, hd).transpose(0, 2, 1, 3)
    k = k.reshape(B, T, n_head, hd).transpose(0, 2, 1, 3)
    v = v.reshape(B, T, n_head, hd).transpose(0, 2, 1, 3)
    att = jnp.einsum("bhtd,bhsd->bhts", q, k) / math.sqrt(hd)
    mask = jnp.tril(jnp.ones((T, T), dtype=bool))
    att = jnp.where(mask[None, None], att, -jnp.inf)
    att = jax.nn.softmax(att, axis=-1)
    y = jnp.einsum("bhts,bhsd->bhtd", att, v)
    y = y.transpose(0, 2, 1, 3).reshape(B, T, C)
    y = y @ params["w_proj"] + params["b_proj"]
    x1 = x + y
    h2 = ln(x1, params["ln2_w"], params["ln2_b"])
    a = h2 @ params["w_fc"] + params["b_fc"]
    g = 0.5 * a * (1.0 + jnp.tanh(0.7978845608028654 * (a + 0.044715 * a ** 3)))
    m = g @ params["w_fc2"] + params["b_fc2"]
    return x1 + m


def make_params(key, C):
    ks = jax.random.split(key, 8)
    std = 0.02
    f32 = jnp.float32
    return {
        "ln1_w": jnp.ones((C,), f32), "ln1_b": jnp.zeros((C,), f32),
        "w_qkv": (jax.random.normal(ks[0], (C, 3 * C)) * std).astype(f32),
        "b_qkv": (jax.random.normal(ks[1], (3 * C,)) * std).astype(f32),
        "w_proj": (jax.random.normal(ks[2], (C, C)) * std).astype(f32),
        "b_proj": (jax.random.normal(ks[3], (C,)) * std).astype(f32),
        "ln2_w": jnp.ones((C,), f32), "ln2_b": jnp.zeros((C,), f32),
        "w_fc": (jax.random.normal(ks[4], (C, 4 * C)) * std).astype(f32),
        "b_fc": (jax.random.normal(ks[5], (4 * C,)) * std).astype(f32),
        "w_fc2": (jax.random.normal(ks[6], (4 * C, C)) * std).astype(f32),
        "b_fc2": (jax.random.normal(ks[7], (C,)) * std).astype(f32),
    }


if __name__ == "__main__":
    B, T, C = 2, 8, 32      # batch=2, block_size=8, n_embd=32, n_head=4
    key = jax.random.PRNGKey(0)
    kx, kp = jax.random.split(key)
    x = jax.random.normal(kx, (B, T, C), dtype=jnp.float32)
    params = make_params(kp, C)

    out = jax.block_until_ready(gpt2_block(x, params))
    ref = jax.block_until_ready(reference_block(x, params))

    # Kernel feeds bf16 operands to the MXU (f32 accumulation, f32 LayerNorm /
    # softmax / GELU); reference is pure f32 -> compare at bf16 tolerance.
    np.testing.assert_allclose(np.asarray(out), np.asarray(ref),
                               atol=1e-2, rtol=1e-2)
    print("KERNEL_OK")
</pallas_src>

<mosaic_0001>
module attributes {stable_mosaic.version = 11 : i64} {
  func.func @block_kernel(%arg0: i32, %arg1: memref<1x8x32xf32, #tpu.memory_space<vmem>>, %arg2: memref<1x32xf32, #tpu.memory_space<vmem>>, %arg3: memref<1x32xf32, #tpu.memory_space<vmem>>, %arg4: memref<32x32xbf16, #tpu.memory_space<vmem>>, %arg5: memref<1x32xf32, #tpu.memory_space<vmem>>, %arg6: memref<32x32xbf16, #tpu.memory_space<vmem>>, %arg7: memref<1x32xf32, #tpu.memory_space<vmem>>, %arg8: memref<32x32xbf16, #tpu.memory_space<vmem>>, %arg9: memref<1x32xf32, #tpu.memory_space<vmem>>, %arg10: memref<32x32xbf16, #tpu.memory_space<vmem>>, %arg11: memref<1x32xf32, #tpu.memory_space<vmem>>, %arg12: memref<1x32xf32, #tpu.memory_space<vmem>>, %arg13: memref<1x32xf32, #tpu.memory_space<vmem>>, %arg14: memref<32x128xbf16, #tpu.memory_space<vmem>>, %arg15: memref<1x128xf32, #tpu.memory_space<vmem>>, %arg16: memref<128x32xbf16, #tpu.memory_space<vmem>>, %arg17: memref<1x32xf32, #tpu.memory_space<vmem>>, %arg18: memref<1x8x32xf32, #tpu.memory_space<vmem>>) attributes {dimension_semantics = [#tpu.dimension_semantics<parallel>], iteration_bounds = array<i64: 2>, scalar_prefetch = 0 : i64, scratch_operands = 0 : i64, tpu.core_type = #tpu.core_type<tc>, window_params = [{transform_indices = @transform_0, window_bounds = array<i64: 1, 8, 32>}, {pipeline_mode = #tpu.pipeline_mode<synchronous>, transform_indices = @transform_1, window_bounds = array<i64: 1, 32>}, {pipeline_mode = #tpu.pipeline_mode<synchronous>, transform_indices = @transform_2, window_bounds = array<i64: 1, 32>}, {pipeline_mode = #tpu.pipeline_mode<synchronous>, transform_indices = @transform_3, window_bounds = array<i64: 32, 32>}, {pipeline_mode = #tpu.pipeline_mode<synchronous>, transform_indices = @transform_4, window_bounds = array<i64: 1, 32>}, {pipeline_mode = #tpu.pipeline_mode<synchronous>, transform_indices = @transform_5, window_bounds = array<i64: 32, 32>}, {pipeline_mode = #tpu.pipeline_mode<synchronous>, transform_indices = @transform_6, window_bounds = array<i64: 1, 32>}, {pipeline_mode = #tpu.pipeline_mode<synchronous>, transform_indices = @transform_7, window_bounds = array<i64: 32, 32>}, {pipeline_mode = #tpu.pipeline_mode<synchronous>, transform_indices = @transform_8, window_bounds = array<i64: 1, 32>}, {pipeline_mode = #tpu.pipeline_mode<synchronous>, transform_indices = @transform_9, window_bounds = array<i64: 32, 32>}, {pipeline_mode = #tpu.pipeline_mode<synchronous>, transform_indices = @transform_10, window_bounds = array<i64: 1, 32>}, {pipeline_mode = #tpu.pipeline_mode<synchronous>, transform_indices = @transform_11, window_bounds = array<i64: 1, 32>}, {pipeline_mode = #tpu.pipeline_mode<synchronous>, transform_indices = @transform_12, window_bounds = array<i64: 1, 32>}, {pipeline_mode = #tpu.pipeline_mode<synchronous>, transform_indices = @transform_13, window_bounds = array<i64: 32, 128>}, {pipeline_mode = #tpu.pipeline_mode<synchronous>, transform_indices = @transform_14, window_bounds = array<i64: 1, 128>}, {pipeline_mode = #tpu.pipeline_mode<synchronous>, transform_indices = @transform_15, window_bounds = array<i64: 128, 32>}, {pipeline_mode = #tpu.pipeline_mode<synchronous>, transform_indices = @transform_16, window_bounds = array<i64: 1, 32>}, {transform_indices = @transform_17, window_bounds = array<i64: 1, 8, 32>}]} {
    %c0 = arith.constant 0 : index
    %c0_0 = arith.constant 0 : index
    %c0_1 = arith.constant 0 : index
    %0 = vector.load %arg1[%c0, %c0_0, %c0_1] : memref<1x8x32xf32, #tpu.memory_space<vmem>>, vector<1x8x32xf32>
    %1 = vector.shape_cast %0 : vector<1x8x32xf32> to vector<8x32xf32>
    %c0_2 = arith.constant 0 : index
    %c0_3 = arith.constant 0 : index
    %2 = vector.load %arg2[%c0_2, %c0_3] : memref<1x32xf32, #tpu.memory_space<vmem>>, vector<1x32xf32>
    %c0_4 = arith.constant 0 : index
    %c0_5 = arith.constant 0 : index
    %3 = vector.load %arg3[%c0_4, %c0_5] : memref<1x32xf32, #tpu.memory_space<vmem>>, vector<1x32xf32>
    %cst = arith.constant dense<0.000000e+00> : vector<8xf32>
    %4 = vector.multi_reduction <add>, %1, %cst [1] : vector<8x32xf32> to vector<8xf32>
    %5 = vector.shape_cast %4 : vector<8xf32> to vector<8x1xf32>
    %cst_6 = arith.constant 3.200000e+01 : f32
    %6 = vector.broadcast %cst_6 : f32 to vector<8x1xf32>
    %7 = arith.divf %5, %6 : vector<8x1xf32>
    %8 = vector.broadcast %7 : vector<8x1xf32> to vector<8x32xf32>
    %9 = arith.subf %1, %8 : vector<8x32xf32>
    %10 = arith.mulf %9, %9 : vector<8x32xf32>
    %cst_7 = arith.constant dense<0.000000e+00> : vector<8xf32>
    %11 = vector.multi_reduction <add>, %10, %cst_7 [1] : vector<8x32xf32> to vector<8xf32>
    %12 = vector.shape_cast %11 : vector<8xf32> to vector<8x1xf32>
    %cst_8 = arith.constant 3.200000e+01 : f32
    %13 = vector.broadcast %cst_8 : f32 to vector<8x1xf32>
    %14 = arith.divf %12, %13 : vector<8x1xf32>
    %15 = vector.broadcast %7 : vector<8x1xf32> to vector<8x32xf32>
    %16 = arith.subf %1, %15 : vector<8x32xf32>
    %cst_9 = arith.constant 9.99999974E-6 : f32
    %17 = vector.broadcast %cst_9 : f32 to vector<8x1xf32>
    %18 = arith.addf %14, %17 : vector<8x1xf32>
    %19 = math.rsqrt %18 : vector<8x1xf32>
    %20 = vector.broadcast %19 : vector<8x1xf32> to vector<8x32xf32>
    %21 = arith.mulf %16, %20 : vector<8x32xf32>
    %22 = vector.broadcast %2 : vector<1x32xf32> to vector<8x32xf32>
    %23 = arith.mulf %21, %22 : vector<8x32xf32>
    %24 = vector.broadcast %3 : vector<1x32xf32> to vector<8x32xf32>
    %25 = arith.addf %23, %24 : vector<8x32xf32>
    %26 = arith.truncf %25 : vector<8x32xf32> to vector<8x32xbf16>
    %c0_10 = arith.constant 0 : index
    %c0_11 = arith.constant 0 : index
    %27 = vector.load %arg4[%c0_10, %c0_11] : memref<32x32xbf16, #tpu.memory_space<vmem>>, vector<32x32xbf16>
    %cst_12 = arith.constant dense<0.000000e+00> : vector<8x32xf32>
    %28 = tpu.matmul %26, %27, %cst_12 {dimension_numbers = #tpu.dot_dimension_numbers<[1], [0], [0], [1], [0, 0, 1, 1], [], []>} : vector<8x32xbf16>, vector<32x32xbf16>, vector<8x32xf32> -> vector<8x32xf32>
    %c0_13 = arith.constant 0 : index
    %c0_14 = arith.constant 0 : index
    %29 = vector.load %arg5[%c0_13, %c0_14] : memref<1x32xf32, #tpu.memory_space<vmem>>, vector<1x32xf32>
    %30 = vector.broadcast %29 : vector<1x32xf32> to vector<8x32xf32>
    %31 = arith.addf %28, %30 : vector<8x32xf32>
    %32 = arith.truncf %31 : vector<8x32xf32> to vector<8x32xbf16>
    %c0_15 = arith.constant 0 : index
    %c0_16 = arith.constant 0 : index
    %33 = vector.load %arg6[%c0_15, %c0_16] : memref<32x32xbf16, #tpu.memory_space<vmem>>, vector<32x32xbf16>
    %cst_17 = arith.constant dense<0.000000e+00> : vector<8x32xf32>
    %34 = tpu.matmul %26, %33, %cst_17 {dimension_numbers = #tpu.dot_dimension_numbers<[1], [0], [0], [1], [0, 0, 1, 1], [], []>} : vector<8x32xbf16>, vector<32x32xbf16>, vector<8x32xf32> -> vector<8x32xf32>
    %c0_18 = arith.constant 0 : index
    %c0_19 = arith.constant 0 : index
    %35 = vector.load %arg7[%c0_18, %c0_19] : memref<1x32xf32, #tpu.memory_space<vmem>>, vector<1x32xf32>
    %36 = vector.broadcast %35 : vector<1x32xf32> to vector<8x32xf32>
    %37 = arith.addf %34, %36 : vector<8x32xf32>
    %38 = arith.truncf %37 : vector<8x32xf32> to vector<8x32xbf16>
    %c0_20 = arith.constant 0 : index
    %c0_21 = arith.constant 0 : index
    %39 = vector.load %arg8[%c0_20, %c0_21] : memref<32x32xbf16, #tpu.memory_space<vmem>>, vector<32x32xbf16>
    %cst_22 = arith.constant dense<0.000000e+00> : vector<8x32xf32>
    %40 = tpu.matmul %26, %39, %cst_22 {dimension_numbers = #tpu.dot_dimension_numbers<[1], [0], [0], [1], [0, 0, 1, 1], [], []>} : vector<8x32xbf16>, vector<32x32xbf16>, vector<8x32xf32> -> vector<8x32xf32>
    %c0_23 = arith.constant 0 : index
    %c0_24 = arith.constant 0 : index
    %41 = vector.load %arg9[%c0_23, %c0_24] : memref<1x32xf32, #tpu.memory_space<vmem>>, vector<1x32xf32>
    %42 = vector.broadcast %41 : vector<1x32xf32> to vector<8x32xf32>
    %43 = arith.addf %40, %42 : vector<8x32xf32>
    %44 = arith.truncf %43 : vector<8x32xf32> to vector<8x32xbf16>
    %45 = tpu.iota {dimensions = array<i32: 0>} : vector<8x8xi32>
    %46 = tpu.iota {dimensions = array<i32: 1>} : vector<8x8xi32>
    %47 = arith.cmpi sle, %46, %45 : vector<8x8xi32>
    %cst_25 = arith.constant 0.000000e+00 : f32
    %cst_26 = arith.constant -1.000000e+30 : f32
    %48 = vector.broadcast %cst_25 : f32 to vector<8x8xf32>
    %49 = vector.broadcast %cst_26 : f32 to vector<8x8xf32>
    %50 = arith.select %47, %48, %49 : vector<8x8xi1>, vector<8x8xf32>
    %51 = vector.extract_strided_slice %32 {offsets = [0, 0], sizes = [8, 8], strides = [1, 1]} : vector<8x32xbf16> to vector<8x8xbf16>
    %52 = vector.extract_strided_slice %38 {offsets = [0, 0], sizes = [8, 8], strides = [1, 1]} : vector<8x32xbf16> to vector<8x8xbf16>
    %53 = vector.extract_strided_slice %44 {offsets = [0, 0], sizes = [8, 8], strides = [1, 1]} : vector<8x32xbf16> to vector<8x8xbf16>
    "tpu.trace_start"() <{level = 10 : i32, message = "nd,md->nm"}> : () -> ()
    %cst_27 = arith.constant dense<0.000000e+00> : vector<8x8xf32>
    %54 = tpu.matmul %51, %52, %cst_27 {dimension_numbers = #tpu.dot_dimension_numbers<[1], [1], [0], [0], [0, 0, 1, 0], [], []>} : vector<8x8xbf16>, vector<8x8xbf16>, vector<8x8xf32> -> vector<8x8xf32>
    "tpu.trace_stop"() : () -> ()
    %55 = arith.addf %54, %50 : vector<8x8xf32>
    %cst_28 = arith.constant dense<0xFF800000> : vector<8xf32>
    %56 = vector.multi_reduction <maximumf>, %55, %cst_28 [1] : vector<8x8xf32> to vector<8xf32>
    %57 = vector.shape_cast %56 : vector<8xf32> to vector<8x1xf32>
    %58 = vector.broadcast %57 : vector<8x1xf32> to vector<8x8xf32>
    %59 = arith.subf %55, %58 : vector<8x8xf32>
    %60 = math.exp %59 : vector<8x8xf32>
    %cst_29 = arith.constant dense<0.000000e+00> : vector<8xf32>
    %61 = vector.multi_reduction <add>, %60, %cst_29 [1] : vector<8x8xf32> to vector<8xf32>
    %62 = vector.shape_cast %61 : vector<8xf32> to vector<8x1xf32>
    %63 = tpu.reciprocal %62 {approx = true} : vector<8x1xf32> -> vector<8x1xf32>
    %64 = vector.broadcast %63 : vector<8x1xf32> to vector<8x8xf32>
    %65 = arith.mulf %60, %64 : vector<8x8xf32>
    %66 = arith.truncf %65 : vector<8x8xf32> to vector<8x8xbf16>
    %cst_30 = arith.constant dense<0.000000e+00> : vector<8x8xf32>
    %67 = tpu.matmul %66, %53, %cst_30 {dimension_numbers = #tpu.dot_dimension_numbers<[1], [0], [0], [1], [0, 0, 1, 1], [], []>} : vector<8x8xbf16>, vector<8x8xbf16>, vector<8x8xf32> -> vector<8x8xf32>
    %68 = vector.extract_strided_slice %32 {offsets = [0, 8], sizes = [8, 8], strides = [1, 1]} : vector<8x32xbf16> to vector<8x8xbf16>
    %69 = vector.extract_strided_slice %38 {offsets = [0, 8], sizes = [8, 8], strides = [1, 1]} : vector<8x32xbf16> to vector<8x8xbf16>
    %70 = vector.extract_strided_slice %44 {offsets = [0, 8], sizes = [8, 8], strides = [1, 1]} : vector<8x32xbf16> to vector<8x8xbf16>
    "tpu.trace_start"() <{level = 10 : i32, message = "nd,md->nm"}> : () -> ()
    %cst_31 = arith.constant dense<0.000000e+00> : vector<8x8xf32>
    %71 = tpu.matmul %68, %69, %cst_31 {dimension_numbers = #tpu.dot_dimension_numbers<[1], [1], [0], [0], [0, 0, 1, 0], [], []>} : vector<8x8xbf16>, vector<8x8xbf16>, vector<8x8xf32> -> vector<8x8xf32>
    "tpu.trace_stop"() : () -> ()
    %72 = arith.addf %71, %50 : vector<8x8xf32>
    %cst_32 = arith.constant dense<0xFF800000> : vector<8xf32>
    %73 = vector.multi_reduction <maximumf>, %72, %cst_32 [1] : vector<8x8xf32> to vector<8xf32>
    %74 = vector.shape_cast %73 : vector<8xf32> to vector<8x1xf32>
    %75 = vector.broadcast %74 : vector<8x1xf32> to vector<8x8xf32>
    %76 = arith.subf %72, %75 : vector<8x8xf32>
    %77 = math.exp %76 : vector<8x8xf32>
    %cst_33 = arith.constant dense<0.000000e+00> : vector<8xf32>
    %78 = vector.multi_reduction <add>, %77, %cst_33 [1] : vector<8x8xf32> to vector<8xf32>
    %79 = vector.shape_cast %78 : vector<8xf32> to vector<8x1xf32>
    %80 = tpu.reciprocal %79 {approx = true} : vector<8x1xf32> -> vector<8x1xf32>
    %81 = vector.broadcast %80 : vector<8x1xf32> to vector<8x8xf32>
    %82 = arith.mulf %77, %81 : vector<8x8xf32>
    %83 = arith.truncf %82 : vector<8x8xf32> to vector<8x8xbf16>
    %cst_34 = arith.constant dense<0.000000e+00> : vector<8x8xf32>
    %84 = tpu.matmul %83, %70, %cst_34 {dimension_numbers = #tpu.dot_dimension_numbers<[1], [0], [0], [1], [0, 0, 1, 1], [], []>} : vector<8x8xbf16>, vector<8x8xbf16>, vector<8x8xf32> -> vector<8x8xf32>
    %85 = vector.extract_strided_slice %32 {offsets = [0, 16], sizes = [8, 8], strides = [1, 1]} : vector<8x32xbf16> to vector<8x8xbf16>
    %86 = vector.extract_strided_slice %38 {offsets = [0, 16], sizes = [8, 8], strides = [1, 1]} : vector<8x32xbf16> to vector<8x8xbf16>
    %87 = vector.extract_strided_slice %44 {offsets = [0, 16], sizes = [8, 8], strides = [1, 1]} : vector<8x32xbf16> to vector<8x8xbf16>
    "tpu.trace_start"() <{level = 10 : i32, message = "nd,md->nm"}> : () -> ()
    %cst_35 = arith.constant dense<0.000000e+00> : vector<8x8xf32>
    %88 = tpu.matmul %85, %86, %cst_35 {dimension_numbers = #tpu.dot_dimension_numbers<[1], [1], [0], [0], [0, 0, 1, 0], [], []>} : vector<8x8xbf16>, vector<8x8xbf16>, vector<8x8xf32> -> vector<8x8xf32>
    "tpu.trace_stop"() : () -> ()
    %89 = arith.addf %88, %50 : vector<8x8xf32>
    %cst_36 = arith.constant dense<0xFF800000> : vector<8xf32>
    %90 = vector.multi_reduction <maximumf>, %89, %cst_36 [1] : vector<8x8xf32> to vector<8xf32>
    %91 = vector.shape_cast %90 : vector<8xf32> to vector<8x1xf32>
    %92 = vector.broadcast %91 : vector<8x1xf32> to vector<8x8xf32>
    %93 = arith.subf %89, %92 : vector<8x8xf32>
    %94 = math.exp %93 : vector<8x8xf32>
    %cst_37 = arith.constant dense<0.000000e+00> : vector<8xf32>
    %95 = vector.multi_reduction <add>, %94, %cst_37 [1] : vector<8x8xf32> to vector<8xf32>
    %96 = vector.shape_cast %95 : vector<8xf32> to vector<8x1xf32>
    %97 = tpu.reciprocal %96 {approx = true} : vector<8x1xf32> -> vector<8x1xf32>
    %98 = vector.broadcast %97 : vector<8x1xf32> to vector<8x8xf32>
    %99 = arith.mulf %94, %98 : vector<8x8xf32>
    %100 = arith.truncf %99 : vector<8x8xf32> to vector<8x8xbf16>
    %cst_38 = arith.constant dense<0.000000e+00> : vector<8x8xf32>
    %101 = tpu.matmul %100, %87, %cst_38 {dimension_numbers = #tpu.dot_dimension_numbers<[1], [0], [0], [1], [0, 0, 1, 1], [], []>} : vector<8x8xbf16>, vector<8x8xbf16>, vector<8x8xf32> -> vector<8x8xf32>
    %102 = vector.extract_strided_slice %32 {offsets = [0, 24], sizes = [8, 8], strides = [1, 1]} : vector<8x32xbf16> to vector<8x8xbf16>
    %103 = vector.extract_strided_slice %38 {offsets = [0, 24], sizes = [8, 8], strides = [1, 1]} : vector<8x32xbf16> to vector<8x8xbf16>
    %104 = vector.extract_strided_slice %44 {offsets = [0, 24], sizes = [8, 8], strides = [1, 1]} : vector<8x32xbf16> to vector<8x8xbf16>
    "tpu.trace_start"() <{level = 10 : i32, message = "nd,md->nm"}> : () -> ()
    %cst_39 = arith.constant dense<0.000000e+00> : vector<8x8xf32>
    %105 = tpu.matmul %102, %103, %cst_39 {dimension_numbers = #tpu.dot_dimension_numbers<[1], [1], [0], [0], [0, 0, 1, 0], [], []>} : vector<8x8xbf16>, vector<8x8xbf16>, vector<8x8xf32> -> vector<8x8xf32>
    "tpu.trace_stop"() : () -> ()
    %106 = arith.addf %105, %50 : vector<8x8xf32>
    %cst_40 = arith.constant dense<0xFF800000> : vector<8xf32>
    %107 = vector.multi_reduction <maximumf>, %106, %cst_40 [1] : vector<8x8xf32> to vector<8xf32>
    %108 = vector.shape_cast %107 : vector<8xf32> to vector<8x1xf32>
    %109 = vector.broadcast %108 : vector<8x1xf32> to vector<8x8xf32>
    %110 = arith.subf %106, %109 : vector<8x8xf32>
    %111 = math.exp %110 : vector<8x8xf32>
    %cst_41 = arith.constant dense<0.000000e+00> : vector<8xf32>
    %112 = vector.multi_reduction <add>, %111, %cst_41 [1] : vector<8x8xf32> to vector<8xf32>
    %113 = vector.shape_cast %112 : vector<8xf32> to vector<8x1xf32>
    %114 = tpu.reciprocal %113 {approx = true} : vector<8x1xf32> -> vector<8x1xf32>
    %115 = vector.broadcast %114 : vector<8x1xf32> to vector<8x8xf32>
    %116 = arith.mulf %111, %115 : vector<8x8xf32>
    %117 = arith.truncf %116 : vector<8x8xf32> to vector<8x8xbf16>
    %cst_42 = arith.constant dense<0.000000e+00> : vector<8x8xf32>
    %118 = tpu.matmul %117, %104, %cst_42 {dimension_numbers = #tpu.dot_dimension_numbers<[1], [0], [0], [1], [0, 0, 1, 1], [], []>} : vector<8x8xbf16>, vector<8x8xbf16>, vector<8x8xf32> -> vector<8x8xf32>
    %119 = tpu.concatenate %67, %84, %101, %118 in 1 : vector<8x8xf32>, vector<8x8xf32>, vector<8x8xf32>, vector<8x8xf32> -> vector<8x32xf32>
    %120 = arith.truncf %119 : vector<8x32xf32> to vector<8x32xbf16>
    %c0_43 = arith.constant 0 : index
    %c0_44 = arith.constant 0 : index
    %121 = vector.load %arg10[%c0_43, %c0_44] : memref<32x32xbf16, #tpu.memory_space<vmem>>, vector<32x32xbf16>
    %cst_45 = arith.constant dense<0.000000e+00> : vector<8x32xf32>
    %122 = tpu.matmul %120, %121, %cst_45 {dimension_numbers = #tpu.dot_dimension_numbers<[1], [0], [0], [1], [0, 0, 1, 1], [], []>} : vector<8x32xbf16>, vector<32x32xbf16>, vector<8x32xf32> -> vector<8x32xf32>
    %c0_46 = arith.constant 0 : index
    %c0_47 = arith.constant 0 : index
    %123 = vector.load %arg11[%c0_46, %c0_47] : memref<1x32xf32, #tpu.memory_space<vmem>>, vector<1x32xf32>
    %124 = vector.broadcast %123 : vector<1x32xf32> to vector<8x32xf32>
    %125 = arith.addf %122, %124 : vector<8x32xf32>
    %126 = arith.addf %1, %125 : vector<8x32xf32>
    %c0_48 = arith.constant 0 : index
    %c0_49 = arith.constant 0 : index
    %127 = vector.load %arg12[%c0_48, %c0_49] : memref<1x32xf32, #tpu.memory_space<vmem>>, vector<1x32xf32>
    %c0_50 = arith.constant 0 : index
    %c0_51 = arith.constant 0 : index
    %128 = vector.load %arg13[%c0_50, %c0_51] : memref<1x32xf32, #tpu.memory_space<vmem>>, vector<1x32xf32>
    %cst_52 = arith.constant dense<0.000000e+00> : vector<8xf32>
    %129 = vector.multi_reduction <add>, %126, %cst_52 [1] : vector<8x32xf32> to vector<8xf32>
    %130 = vector.shape_cast %129 : vector<8xf32> to vector<8x1xf32>
    %cst_53 = arith.constant 3.200000e+01 : f32
    %131 = vector.broadcast %cst_53 : f32 to vector<8x1xf32>
    %132 = arith.divf %130, %131 : vector<8x1xf32>
    %133 = vector.broadcast %132 : vector<8x1xf32> to vector<8x32xf32>
    %134 = arith.subf %126, %133 : vector<8x32xf32>
    %135 = arith.mulf %134, %134 : vector<8x32xf32>
    %cst_54 = arith.constant dense<0.000000e+00> : vector<8xf32>
    %136 = vector.multi_reduction <add>, %135, %cst_54 [1] : vector<8x32xf32> to vector<8xf32>
    %137 = vector.shape_cast %136 : vector<8xf32> to vector<8x1xf32>
    %cst_55 = arith.constant 3.200000e+01 : f32
    %138 = vector.broadcast %cst_55 : f32 to vector<8x1xf32>
    %139 = arith.divf %137, %138 : vector<8x1xf32>
    %140 = vector.broadcast %132 : vector<8x1xf32> to vector<8x32xf32>
    %141 = arith.subf %126, %140 : vector<8x32xf32>
    %cst_56 = arith.constant 9.99999974E-6 : f32
    %142 = vector.broadcast %cst_56 : f32 to vector<8x1xf32>
    %143 = arith.addf %139, %142 : vector<8x1xf32>
    %144 = math.rsqrt %143 : vector<8x1xf32>
    %145 = vector.broadcast %144 : vector<8x1xf32> to vector<8x32xf32>
    %146 = arith.mulf %141, %145 : vector<8x32xf32>
    %147 = vector.broadcast %127 : vector<1x32xf32> to vector<8x32xf32>
    %148 = arith.mulf %146, %147 : vector<8x32xf32>
    %149 = vector.broadcast %128 : vector<1x32xf32> to vector<8x32xf32>
    %150 = arith.addf %148, %149 : vector<8x32xf32>
    %151 = arith.truncf %150 : vector<8x32xf32> to vector<8x32xbf16>
    %c0_57 = arith.constant 0 : index
    %c0_58 = arith.constant 0 : index
    %152 = vector.load %arg14[%c0_57, %c0_58] : memref<32x128xbf16, #tpu.memory_space<vmem>>, vector<32x128xbf16>
    %cst_59 = arith.constant dense<0.000000e+00> : vector<8x128xf32>
    %153 = tpu.matmul %151, %152, %cst_59 {dimension_numbers = #tpu.dot_dimension_numbers<[1], [0], [0], [1], [0, 0, 1, 1], [], []>} : vector<8x32xbf16>, vector<32x128xbf16>, vector<8x128xf32> -> vector<8x128xf32>
    %c0_60 = arith.constant 0 : index
    %c0_61 = arith.constant 0 : index
    %154 = vector.load %arg15[%c0_60, %c0_61] : memref<1x128xf32, #tpu.memory_space<vmem>>, vector<1x128xf32>
    %155 = vector.broadcast %154 : vector<1x128xf32> to vector<8x128xf32>
    %156 = arith.addf %153, %155 : vector<8x128xf32>
    %cst_62 = arith.constant 5.000000e-01 : f32
    %157 = vector.broadcast %cst_62 : f32 to vector<8x128xf32>
    %158 = arith.mulf %157, %156 : vector<8x128xf32>
    %cst_63 = arith.constant 4.471500e-02 : f32
    %159 = vector.broadcast %cst_63 : f32 to vector<8x128xf32>
    %160 = arith.mulf %159, %156 : vector<8x128xf32>
    %161 = arith.mulf %160, %156 : vector<8x128xf32>
    %162 = arith.mulf %161, %156 : vector<8x128xf32>
    %163 = arith.addf %156, %162 : vector<8x128xf32>
    %cst_64 = arith.constant 0.797884583 : f32
    %164 = vector.broadcast %cst_64 : f32 to vector<8x128xf32>
    %165 = arith.mulf %164, %163 : vector<8x128xf32>
    %166 = math.tanh %165 : vector<8x128xf32>
    %cst_65 = arith.constant 1.000000e+00 : f32
    %167 = vector.broadcast %cst_65 : f32 to vector<8x128xf32>
    %168 = arith.addf %167, %166 : vector<8x128xf32>
    %169 = arith.mulf %158, %168 : vector<8x128xf32>
    %170 = arith.truncf %169 : vector<8x128xf32> to vector<8x128xbf16>
    %c0_66 = arith.constant 0 : index
    %c0_67 = arith.constant 0 : index
    %171 = vector.load %arg16[%c0_66, %c0_67] : memref<128x32xbf16, #tpu.memory_space<vmem>>, vector<128x32xbf16>
    %cst_68 = arith.constant dense<0.000000e+00> : vector<8x32xf32>
    %172 = tpu.matmul %170, %171, %cst_68 {dimension_numbers = #tpu.dot_dimension_numbers<[1], [0], [0], [1], [0, 0, 1, 1], [], []>} : vector<8x128xbf16>, vector<128x32xbf16>, vector<8x32xf32> -> vector<8x32xf32>
    %c0_69 = arith.constant 0 : index
    %c0_70 = arith.constant 0 : index
    %173 = vector.load %arg17[%c0_69, %c0_70] : memref<1x32xf32, #tpu.memory_space<vmem>>, vector<1x32xf32>
    %174 = vector.broadcast %173 : vector<1x32xf32> to vector<8x32xf32>
    %175 = arith.addf %172, %174 : vector<8x32xf32>
    %176 = arith.addf %126, %175 : vector<8x32xf32>
    %c0_71 = arith.constant 0 : index
    %c0_72 = arith.constant 0 : index
    %c0_73 = arith.constant 0 : index
    %177 = vector.load %arg18[%c0_71, %c0_72, %c0_73] : memref<1x8x32xf32, #tpu.memory_space<vmem>>, vector<1x8x32xf32>
    %178 = vector.shape_cast %177 : vector<1x8x32xf32> to vector<8x32xf32>
    %179 = vector.shape_cast %176 : vector<8x32xf32> to vector<1x8x32xf32>
    tpu.vector_store %arg18[%c0_71, %c0_72, %c0_73], %179 {strides = array<i32>} : memref<1x8x32xf32, #tpu.memory_space<vmem>>, vector<1x8x32xf32>,
    return
  }
  func.func @transform_0(%arg0: i32) -> (i32, i32, i32) {
    %c0_i32 = arith.constant 0 : i32
    %c0_i32_0 = arith.constant 0 : i32
    %c0_i32_1 = arith.constant 0 : i32
    return %arg0, %c0_i32, %c0_i32_0 : i32, i32, i32
  }
  func.func @transform_1(%arg0: i32) -> (i32, i32) {
    %c0_i32 = arith.constant 0 : i32
    %c0_i32_0 = arith.constant 0 : i32
    %c0_i32_1 = arith.constant 0 : i32
    return %c0_i32, %c0_i32_0 : i32, i32
  }
  func.func @transform_2(%arg0: i32) -> (i32, i32) {
    %c0_i32 = arith.constant 0 : i32
    %c0_i32_0 = arith.constant 0 : i32
    %c0_i32_1 = arith.constant 0 : i32
    return %c0_i32, %c0_i32_0 : i32, i32
  }
  func.func @transform_3(%arg0: i32) -> (i32, i32) {
    %c0_i32 = arith.constant 0 : i32
    %c0_i32_0 = arith.constant 0 : i32
    %c0_i32_1 = arith.constant 0 : i32
    return %c0_i32, %c0_i32_0 : i32, i32
  }
  func.func @transform_4(%arg0: i32) -> (i32, i32) {
    %c0_i32 = arith.constant 0 : i32
    %c0_i32_0 = arith.constant 0 : i32
    %c0_i32_1 = arith.constant 0 : i32
    return %c0_i32, %c0_i32_0 : i32, i32
  }
  func.func @transform_5(%arg0: i32) -> (i32, i32) {
    %c0_i32 = arith.constant 0 : i32
    %c0_i32_0 = arith.constant 0 : i32
    %c0_i32_1 = arith.constant 0 : i32
    return %c0_i32, %c0_i32_0 : i32, i32
  }
  func.func @transform_6(%arg0: i32) -> (i32, i32) {
    %c0_i32 = arith.constant 0 : i32
    %c0_i32_0 = arith.constant 0 : i32
    %c0_i32_1 = arith.constant 0 : i32
    return %c0_i32, %c0_i32_0 : i32, i32
  }
  func.func @transform_7(%arg0: i32) -> (i32, i32) {
    %c0_i32 = arith.constant 0 : i32
    %c0_i32_0 = arith.constant 0 : i32
    %c0_i32_1 = arith.constant 0 : i32
    return %c0_i32, %c0_i32_0 : i32, i32
  }
  func.func @transform_8(%arg0: i32) -> (i32, i32) {
    %c0_i32 = arith.constant 0 : i32
    %c0_i32_0 = arith.constant 0 : i32
    %c0_i32_1 = arith.constant 0 : i32
    return %c0_i32, %c0_i32_0 : i32, i32
  }
  func.func @transform_9(%arg0: i32) -> (i32, i32) {
    %c0_i32 = arith.constant 0 : i32
    %c0_i32_0 = arith.constant 0 : i32
    %c0_i32_1 = arith.constant 0 : i32
    return %c0_i32, %c0_i32_0 : i32, i32
  }
  func.func @transform_10(%arg0: i32) -> (i32, i32) {
    %c0_i32 = arith.constant 0 : i32
    %c0_i32_0 = arith.constant 0 : i32
    %c0_i32_1 = arith.constant 0 : i32
    return %c0_i32, %c0_i32_0 : i32, i32
  }
  func.func @transform_11(%arg0: i32) -> (i32, i32) {
    %c0_i32 = arith.constant 0 : i32
    %c0_i32_0 = arith.constant 0 : i32
    %c0_i32_1 = arith.constant 0 : i32
    return %c0_i32, %c0_i32_0 : i32, i32
  }
  func.func @transform_12(%arg0: i32) -> (i32, i32) {
    %c0_i32 = arith.constant 0 : i32
    %c0_i32_0 = arith.constant 0 : i32
    %c0_i32_1 = arith.constant 0 : i32
    return %c0_i32, %c0_i32_0 : i32, i32
  }
  func.func @transform_13(%arg0: i32) -> (i32, i32) {
    %c0_i32 = arith.constant 0 : i32
    %c0_i32_0 = arith.constant 0 : i32
    %c0_i32_1 = arith.constant 0 : i32
    return %c0_i32, %c0_i32_0 : i32, i32
  }
  func.func @transform_14(%arg0: i32) -> (i32, i32) {
    %c0_i32 = arith.constant 0 : i32
    %c0_i32_0 = arith.constant 0 : i32
    %c0_i32_1 = arith.constant 0 : i32
    return %c0_i32, %c0_i32_0 : i32, i32
  }
  func.func @transform_15(%arg0: i32) -> (i32, i32) {
    %c0_i32 = arith.constant 0 : i32
    %c0_i32_0 = arith.constant 0 : i32
    %c0_i32_1 = arith.constant 0 : i32
    return %c0_i32, %c0_i32_0 : i32, i32
  }
  func.func @transform_16(%arg0: i32) -> (i32, i32) {
    %c0_i32 = arith.constant 0 : i32
    %c0_i32_0 = arith.constant 0 : i32
    %c0_i32_1 = arith.constant 0 : i32
    return %c0_i32, %c0_i32_0 : i32, i32
  }
  func.func @transform_17(%arg0: i32) -> (i32, i32, i32) {
    %c0_i32 = arith.constant 0 : i32
    %c0_i32_0 = arith.constant 0 : i32
    %c0_i32_1 = arith.constant 0 : i32
    return %arg0, %c0_i32, %c0_i32_0 : i32, i32, i32
  }
}

</mosaic_0001>

<llo_original>
// kernel: tpu_custom_call.1
$region0: #{tpu_custom_call.1}
  #allocation0 [shape = 'u32[]', space=smem, size = 0x4, offset = 0x4, fixed_abs, tag = 'smem constant byte address 0x4 - core index']
  #allocation1 [shape = 'u32[144,128]{1,0:T(1,128)}', space=vmem, size = 0x12000, scoped, tag = 'internal scratch']
  %s0 = inlined_call_operand.vmem [shape: f32[2,8,32], index: 0, kind: input, shape index: {}]
  %s1 = inlined_call_operand.vmem [shape: f32[1,32], index: 1, kind: input, shape index: {}]
  %s2 = inlined_call_operand.vmem [shape: f32[1,32], index: 2, kind: input, shape index: {}]
  %s3 = inlined_call_operand.vmem [shape: bf16[32,32], index: 3, kind: input, shape index: {}]
  %s4 = inlined_call_operand.hbm [shape: f32[1,32], index: 4, kind: input, shape index: {}]
  %s5 = inlined_call_operand.vmem [shape: bf16[32,32], index: 5, kind: input, shape index: {}]
  %s6 = inlined_call_operand.hbm [shape: f32[1,32], index: 6, kind: input, shape index: {}]
  %s7 = inlined_call_operand.vmem [shape: bf16[32,32], index: 7, kind: input, shape index: {}]
  %s8 = inlined_call_operand.hbm [shape: f32[1,32], index: 8, kind: input, shape index: {}]
  %s9 = inlined_call_operand.vmem [shape: bf16[32,32], index: 9, kind: input, shape index: {}]
  %s10 = inlined_call_operand.vmem [shape: f32[1,32], index: 10, kind: input, shape index: {}]
  %s11 = inlined_call_operand.vmem [shape: f32[1,32], index: 11, kind: input, shape index: {}]
  %s12 = inlined_call_operand.vmem [shape: f32[1,32], index: 12, kind: input, shape index: {}]
  %s13 = inlined_call_operand.vmem [shape: bf16[32,128], index: 13, kind: input, shape index: {}]
  %s14 = inlined_call_operand.vmem [shape: f32[1,128], index: 14, kind: input, shape index: {}]
  %s15 = inlined_call_operand.vmem [shape: bf16[128,32], index: 15, kind: input, shape index: {}]
  %s16 = inlined_call_operand.vmem [shape: f32[1,32], index: 16, kind: input, shape index: {}]
  %s17 = inlined_call_operand.hbm [shape: f32[2,8,32], index: 17, kind: output, shape index: {}]
  %s18 = sld [smem:[#allocation0]]
  $region113: #{tpu_custom_call.1} parent=0
    _
  %s20 = ssub.s32 1, %s18
  %s21 = scalar_select 0, %s20, %s18
  $region1: #{tpu_custom_call.1} parent=0
    #allocation2 [shape = 'u8[512]{0}', space=vmem, size = 0x400, scoped, tag = 'input window, operand 4, single buffered']
    #allocation3 [shape = 's32[2]{0}', space=sflag, size = 0x8, scoped, tag = 'scoped memory for tpu_custom_call.1']
    #allocation4 [shape = 's32[2]{0}', space=sflag, size = 0x8, scoped, tag = 'scoped memory for tpu_custom_call.1']
    #allocation5 [shape = 'u8[512]{0}', space=vmem, size = 0x400, scoped, tag = 'input window, operand 6, single buffered']
    #allocation6 [shape = 's32[1]{0}', space=sflag, size = 0x4, scoped, tag = 'scoped memory for tpu_custom_call.1']
    #allocation7 [shape = 'u8[512]{0}', space=vmem, size = 0x400, scoped, tag = 'input window, operand 8, single buffered']
    #allocation8 [shape = 'u8[8192]{0}', space=vmem, size = 0x2000, scoped, tag = 'output window, operand 0']
    %22 = vsyncpa [#allocation3], 0
    %23 = vsyncpa [#allocation6], 0
    %24 = vsyncpa [#allocation4], 0
    %s25 = scalar_lea.sflag [#allocation4], 1
    %26 = vsyncpa %s25, 0
    loop: start=0, step=1, limit=4
    $region2: #{tpu_custom_call.1} parent=1 // loop_pre_header
      _
    $region3: #{tpu_custom_call.1} parent=1 // loop_header
      %s28 = sphi 0, %s32
      %p29 = scmp.ge.s32.totalorder %s28, 4
      %s38 = sphi 0, %s40
      %s41 = sphi 0, %s38
      %s42 = sphi 0, %s41
      %s58 = sphi 0, %s42
      %s62 = sphi 0, %s62
      %s64 = sphi 0, %s62
      %s65 = sphi 0, %s64
      %s79 = sphi 0, %s65
      %s83 = sphi 0, %s83
      %s85 = sphi 0, %s83
      %s86 = sphi 0, %s85
      %s100 = sphi 0, %s86
      %s104 = sphi 0, %s104
      %s106 = sphi 0, %s104
      %s107 = sphi 0, %s106
      %s121 = sphi 0, %s107
      %s125 = sphi 0, %s125
      %s127 = sphi 0, %s125
      %s128 = sphi 0, %s127
      %s142 = sphi 0, %s128
      %s146 = sphi 0, %s146
      %s148 = sphi 0, %s146
      %s149 = sphi 0, %s148
      %s163 = sphi 0, %s149
      %s167 = sphi 0, %s167
      %s169 = sphi 0, %s167
      %s170 = sphi 0, %s169
      %s184 = sphi 0, %s170
      %s188 = sphi 0, %s188
      %s190 = sphi 0, %s188
      %s191 = sphi 0, %s190
      %s205 = sphi 0, %s191
      %s209 = sphi 0, %s209
      %s211 = sphi 0, %s209
      %s212 = sphi 0, %s211
      %s226 = sphi 0, %s212
      %s230 = sphi 0, %s230
      %s232 = sphi 0, %s230
      %s233 = sphi 0, %s232
      %s247 = sphi 0, %s233
      %s251 = sphi 0, %s251
      %s253 = sphi 0, %s251
      %s254 = sphi 0, %s253
      %s268 = sphi 0, %s254
      %s272 = sphi 0, %s272
      %s274 = sphi 0, %s272
      %s275 = sphi 0, %s274
      %s289 = sphi 0, %s275
      %s293 = sphi 0, %s293
      %s295 = sphi 0, %s293
      %s296 = sphi 0, %s295
      %s310 = sphi 0, %s296
      %s314 = sphi 0, %s314
      %s316 = sphi 0, %s314
      %s317 = sphi 0, %s316
      %s331 = sphi 0, %s317
      %s335 = sphi 0, %s335
      %s337 = sphi 0, %s335
      %s338 = sphi 0, %s337
      %s352 = sphi 0, %s338
      %s356 = sphi 0, %s356
      %s358 = sphi 0, %s356
      %s359 = sphi 0, %s358
      %s373 = sphi 0, %s359
      %s377 = sphi 0, %s377
      %s379 = sphi 0, %s377
      %s380 = sphi 0, %s379
      %s394 = sphi 0, %s380
      %s400 = sphi 0, %s402
      %s403 = sphi 0, %s400
      %s404 = sphi 0, %s403
      %s420 = sphi 0, %s404
    $region4: #{tpu_custom_call.1} parent=1 // loop_header_branch
      %31 = sbr.rel (%p29) target = $region8
    $region5: #{tpu_custom_call.1} parent=1 // loop_body
      %s33 = ssub.s32 %s28, 1
      %s34 = ssub.s32 %s28, 2
      %s35 = sadd.s32 %s28, 1
      %s36 = ssub.s32 %s28, %s35
      %p37 = scmp.eq.s32.totalorder %s36, 0
      %s39 = sadd.s32 %s38, 1
      %s40 = scalar_select %p37, %s38, %s39
      %p43 = pneg %p37
      %p44 = scmp.eq.s32.totalorder %s28, 1
      %p45 = por %p43, %p44
      %p46 = scmp.ne.s32.totalorder %s38, %s41
      %p47 = scmp.eq.s32.totalorder %s28, 0
      %p48 = por %p46, %p47
      %p49 = scmp.ne.s32.totalorder %s38, %s41
      %p50 = scmp.eq.s32.totalorder %s33, 1
      %p51 = por %p49, %p50
      %p52 = scmp.ne.s32.totalorder %s41, %s42
      %p53 = scmp.eq.s32.totalorder %s33, 0
      %p54 = por %p52, %p53
      %p55 = scmp.ne.s32.totalorder %s41, %s42
      %p56 = scmp.eq.s32.totalorder %s34, 1
      %p57 = por %p55, %p56
      %p59 = scmp.ne.s32.totalorder %s42, %s58
      %p60 = scmp.eq.s32.totalorder %s34, 0
      %p61 = por %p59, %p60
      %s63 = sadd.s32 %s62, 1
      %p66 = scmp.eq.s32.totalorder %s28, 1
      %p67 = scmp.ne.s32.totalorder %s62, %s64
      %p68 = scmp.eq.s32.totalorder %s28, 0
      %p69 = por %p67, %p68
      %p70 = scmp.ne.s32.totalorder %s62, %s64
      %p71 = scmp.eq.s32.totalorder %s33, 1
      %p72 = por %p70, %p71
      %p73 = scmp.ne.s32.totalorder %s64, %s65
      %p74 = scmp.eq.s32.totalorder %s33, 0
      %p75 = por %p73, %p74
      %p76 = scmp.ne.s32.totalorder %s64, %s65
      %p77 = scmp.eq.s32.totalorder %s34, 1
      %p78 = por %p76, %p77
      %p80 = scmp.ne.s32.totalorder %s65, %s79
      %p81 = scmp.eq.s32.totalorder %s34, 0
      %p82 = por %p80, %p81
      %s84 = sadd.s32 %s83, 1
      %p87 = scmp.eq.s32.totalorder %s28, 1
      %p88 = scmp.ne.s32.totalorder %s83, %s85
      %p89 = scmp.eq.s32.totalorder %s28, 0
      %p90 = por %p88, %p89
      %p91 = scmp.ne.s32.totalorder %s83, %s85
      %p92 = scmp.eq.s32.totalorder %s33, 1
      %p93 = por %p91, %p92
      %p94 = scmp.ne.s32.totalorder %s85, %s86
      %p95 = scmp.eq.s32.totalorder %s33, 0
      %p96 = por %p94, %p95
      %p97 = scmp.ne.s32.totalorder %s85, %s86
      %p98 = scmp.eq.s32.totalorder %s34, 1
      %p99 = por %p97, %p98
      %p101 = scmp.ne.s32.totalorder %s86, %s100
      %p102 = scmp.eq.s32.totalorder %s34, 0
      %p103 = por %p101, %p102
      %s105 = sadd.s32 %s104, 1
      %p108 = scmp.eq.s32.totalorder %s28, 1
      %p109 = scmp.ne.s32.totalorder %s104, %s106
      %p110 = scmp.eq.s32.totalorder %s28, 0
      %p111 = por %p109, %p110
      %p112 = scmp.ne.s32.totalorder %s104, %s106
      %p113 = scmp.eq.s32.totalorder %s33, 1
      %p114 = por %p112, %p113
      %p115 = scmp.ne.s32.totalorder %s106, %s107
      %p116 = scmp.eq.s32.totalorder %s33, 0
      %p117 = por %p115, %p116
      %p118 = scmp.ne.s32.totalorder %s106, %s107
      %p119 = scmp.eq.s32.totalorder %s34, 1
      %p120 = por %p118, %p119
      %p122 = scmp.ne.s32.totalorder %s107, %s121
      %p123 = scmp.eq.s32.totalorder %s34, 0
      %p124 = por %p122, %p123
      %s126 = sadd.s32 %s125, 1
      %p129 = scmp.eq.s32.totalorder %s28, 1
      %p130 = scmp.ne.s32.totalorder %s125, %s127
      %p131 = scmp.eq.s32.totalorder %s28, 0
      %p132 = por %p130, %p131
      %p133 = scmp.ne.s32.totalorder %s125, %s127
      %p134 = scmp.eq.s32.totalorder %s33, 1
      %p135 = por %p133, %p134
      %p136 = scmp.ne.s32.totalorder %s127, %s128
      %p137 = scmp.eq.s32.totalorder %s33, 0
      %p138 = por %p136, %p137
      %p139 = scmp.ne.s32.totalorder %s127, %s128
      %p140 = scmp.eq.s32.totalorder %s34, 1
      %p141 = por %p139, %p140
      %p143 = scmp.ne.s32.totalorder %s128, %s142
      %p144 = scmp.eq.s32.totalorder %s34, 0
      %p145 = por %p143, %p144
      %s147 = sadd.s32 %s146, 1
      %p150 = scmp.eq.s32.totalorder %s28, 1
      %p151 = scmp.ne.s32.totalorder %s146, %s148
      %p152 = scmp.eq.s32.totalorder %s28, 0
      %p153 = por %p151, %p152
      %p154 = scmp.ne.s32.totalorder %s146, %s148
      %p155 = scmp.eq.s32.totalorder %s33, 1
      %p156 = por %p154, %p155
      %p157 = scmp.ne.s32.totalorder %s148, %s149
      %p158 = scmp.eq.s32.totalorder %s33, 0
      %p159 = por %p157, %p158
      %p160 = scmp.ne.s32.totalorder %s148, %s149
      %p161 = scmp.eq.s32.totalorder %s34, 1
      %p162 = por %p160, %p161
      %p164 = scmp.ne.s32.totalorder %s149, %s163
      %p165 = scmp.eq.s32.totalorder %s34, 0
      %p166 = por %p164, %p165
      %s168 = sadd.s32 %s167, 1
      %p171 = scmp.eq.s32.totalorder %s28, 1
      %p172 = scmp.ne.s32.totalorder %s167, %s169
      %p173 = scmp.eq.s32.totalorder %s28, 0
      %p174 = por %p172, %p173
      %p175 = scmp.ne.s32.totalorder %s167, %s169
      %p176 = scmp.eq.s32.totalorder %s33, 1
      %p177 = por %p175, %p176
      %p178 = scmp.ne.s32.totalorder %s169, %s170
      %p179 = scmp.eq.s32.totalorder %s33, 0
      %p180 = por %p178, %p179
      %p181 = scmp.ne.s32.totalorder %s169, %s170
      %p182 = scmp.eq.s32.totalorder %s34, 1
      %p183 = por %p181, %p182
      %p185 = scmp.ne.s32.totalorder %s170, %s184
      %p186 = scmp.eq.s32.totalorder %s34, 0
      %p187 = por %p185, %p186
      %s189 = sadd.s32 %s188, 1
      %p192 = scmp.eq.s32.totalorder %s28, 1
      %p193 = scmp.ne.s32.totalorder %s188, %s190
      %p194 = scmp.eq.s32.totalorder %s28, 0
      %p195 = por %p193, %p194
      %p196 = scmp.ne.s32.totalorder %s188, %s190
      %p197 = scmp.eq.s32.totalorder %s33, 1
      %p198 = por %p196, %p197
      %p199 = scmp.ne.s32.totalorder %s190, %s191
      %p200 = scmp.eq.s32.totalorder %s33, 0
      %p201 = por %p199, %p200
      %p202 = scmp.ne.s32.totalorder %s190, %s191
      %p203 = scmp.eq.s32.totalorder %s34, 1
      %p204 = por %p202, %p203
      %p206 = scmp.ne.s32.totalorder %s191, %s205
      %p207 = scmp.eq.s32.totalorder %s34, 0
      %p208 = por %p206, %p207
      %s210 = sadd.s32 %s209, 1
      %p213 = scmp.eq.s32.totalorder %s28, 1
      %p214 = scmp.ne.s32.totalorder %s209, %s211
      %p215 = scmp.eq.s32.totalorder %s28, 0
      %p216 = por %p214, %p215
      %p217 = scmp.ne.s32.totalorder %s209, %s211
      %p218 = scmp.eq.s32.totalorder %s33, 1
      %p219 = por %p217, %p218
      %p220 = scmp.ne.s32.totalorder %s211, %s212
      %p221 = scmp.eq.s32.totalorder %s33, 0
      %p222 = por %p220, %p221
      %p223 = scmp.ne.s32.totalorder %s211, %s212
      %p224 = scmp.eq.s32.totalorder %s34, 1
      %p225 = por %p223, %p224
      %p227 = scmp.ne.s32.totalorder %s212, %s226
      %p228 = scmp.eq.s32.totalorder %s34, 0
      %p229 = por %p227, %p228
      %s231 = sadd.s32 %s230, 1
      %p234 = scmp.eq.s32.totalorder %s28, 1
      %p235 = scmp.ne.s32.totalorder %s230, %s232
      %p236 = scmp.eq.s32.totalorder %s28, 0
      %p237 = por %p235, %p236
      %p238 = scmp.ne.s32.totalorder %s230, %s232
      %p239 = scmp.eq.s32.totalorder %s33, 1
      %p240 = por %p238, %p239
      %p241 = scmp.ne.s32.totalorder %s232, %s233
      %p242 = scmp.eq.s32.totalorder %s33, 0
      %p243 = por %p241, %p242
      %p244 = scmp.ne.s32.totalorder %s232, %s233
      %p245 = scmp.eq.s32.totalorder %s34, 1
      %p246 = por %p244, %p245
      %p248 = scmp.ne.s32.totalorder %s233, %s247
      %p249 = scmp.eq.s32.totalorder %s34, 0
      %p250 = por %p248, %p249
      %s252 = sadd.s32 %s251, 1
      %p255 = scmp.eq.s32.totalorder %s28, 1
      %p256 = scmp.ne.s32.totalorder %s251, %s253
      %p257 = scmp.eq.s32.totalorder %s28, 0
      %p258 = por %p256, %p257
      %p259 = scmp.ne.s32.totalorder %s251, %s253
      %p260 = scmp.eq.s32.totalorder %s33, 1
      %p261 = por %p259, %p260
      %p262 = scmp.ne.s32.totalorder %s253, %s254
      %p263 = scmp.eq.s32.totalorder %s33, 0
      %p264 = por %p262, %p263
      %p265 = scmp.ne.s32.totalorder %s253, %s254
      %p266 = scmp.eq.s32.totalorder %s34, 1
      %p267 = por %p265, %p266
      %p269 = scmp.ne.s32.totalorder %s254, %s268
      %p270 = scmp.eq.s32.totalorder %s34, 0
      %p271 = por %p269, %p270
      %s273 = sadd.s32 %s272, 1
      %p276 = scmp.eq.s32.totalorder %s28, 1
      %p277 = scmp.ne.s32.totalorder %s272, %s274
      %p278 = scmp.eq.s32.totalorder %s28, 0
      %p279 = por %p277, %p278
      %p280 = scmp.ne.s32.totalorder %s272, %s274
      %p281 = scmp.eq.s32.totalorder %s33, 1
      %p282 = por %p280, %p281
      %p283 = scmp.ne.s32.totalorder %s274, %s275
      %p284 = scmp.eq.s32.totalorder %s33, 0
      %p285 = por %p283, %p284
      %p286 = scmp.ne.s32.totalorder %s274, %s275
      %p287 = scmp.eq.s32.totalorder %s34, 1
      %p288 = por %p286, %p287
      %p290 = scmp.ne.s32.totalorder %s275, %s289
      %p291 = scmp.eq.s32.totalorder %s34, 0
      %p292 = por %p290, %p291
      %s294 = sadd.s32 %s293, 1
      %p297 = scmp.eq.s32.totalorder %s28, 1
      %p298 = scmp.ne.s32.totalorder %s293, %s295
      %p299 = scmp.eq.s32.totalorder %s28, 0
      %p300 = por %p298, %p299
      %p301 = scmp.ne.s32.totalorder %s293, %s295
      %p302 = scmp.eq.s32.totalorder %s33, 1
      %p303 = por %p301, %p302
      %p304 = scmp.ne.s32.totalorder %s295, %s296
      %p305 = scmp.eq.s32.totalorder %s33, 0
      %p306 = por %p304, %p305
      %p307 = scmp.ne.s32.totalorder %s295, %s296
      %p308 = scmp.eq.s32.totalorder %s34, 1
      %p309 = por %p307, %p308
      %p311 = scmp.ne.s32.totalorder %s296, %s310
      %p312 = scmp.eq.s32.totalorder %s34, 0
      %p313 = por %p311, %p312
      %s315 = sadd.s32 %s314, 1
      %p318 = scmp.eq.s32.totalorder %s28, 1
      %p319 = scmp.ne.s32.totalorder %s314, %s316
      %p320 = scmp.eq.s32.totalorder %s28, 0
      %p321 = por %p319, %p320
      %p322 = scmp.ne.s32.totalorder %s314, %s316
      %p323 = scmp.eq.s32.totalorder %s33, 1
      %p324 = por %p322, %p323
      %p325 = scmp.ne.s32.totalorder %s316, %s317
      %p326 = scmp.eq.s32.totalorder %s33, 0
      %p327 = por %p325, %p326
      %p328 = scmp.ne.s32.totalorder %s316, %s317
      %p329 = scmp.eq.s32.totalorder %s34, 1
      %p330 = por %p328, %p329
      %p332 = scmp.ne.s32.totalorder %s317, %s331
      %p333 = scmp.eq.s32.totalorder %s34, 0
      %p334 = por %p332, %p333
      %s336 = sadd.s32 %s335, 1
      %p339 = scmp.eq.s32.totalorder %s28, 1
      %p340 = scmp.ne.s32.totalorder %s335, %s337
      %p341 = scmp.eq.s32.totalorder %s28, 0
      %p342 = por %p340, %p341
      %p343 = scmp.ne.s32.totalorder %s335, %s337
      %p344 = scmp.eq.s32.totalorder %s33, 1
      %p345 = por %p343, %p344
      %p346 = scmp.ne.s32.totalorder %s337, %s338
      %p347 = scmp.eq.s32.totalorder %s33, 0
      %p348 = por %p346, %p347
      %p349 = scmp.ne.s32.totalorder %s337, %s338
      %p350 = scmp.eq.s32.totalorder %s34, 1
      %p351 = por %p349, %p350
      %p353 = scmp.ne.s32.totalorder %s338, %s352
      %p354 = scmp.eq.s32.totalorder %s34, 0
      %p355 = por %p353, %p354
      %s357 = sadd.s32 %s356, 1
      %p360 = scmp.eq.s32.totalorder %s28, 1
      %p361 = scmp.ne.s32.totalorder %s356, %s358
      %p362 = scmp.eq.s32.totalorder %s28, 0
      %p363 = por %p361, %p362
      %p364 = scmp.ne.s32.totalorder %s356, %s358
      %p365 = scmp.eq.s32.totalorder %s33, 1
      %p366 = por %p364, %p365
      %p367 = scmp.ne.s32.totalorder %s358, %s359
      %p368 = scmp.eq.s32.totalorder %s33, 0
      %p369 = por %p367, %p368
      %p370 = scmp.ne.s32.totalorder %s358, %s359
      %p371 = scmp.eq.s32.totalorder %s34, 1
      %p372 = por %p370, %p371
      %p374 = scmp.ne.s32.totalorder %s359, %s373
      %p375 = scmp.eq.s32.totalorder %s34, 0
      %p376 = por %p374, %p375
      %s378 = sadd.s32 %s377, 1
      %p381 = scmp.eq.s32.totalorder %s28, 1
      %p382 = scmp.ne.s32.totalorder %s377, %s379
      %p383 = scmp.eq.s32.totalorder %s28, 0
      %p384 = por %p382, %p383
      %p385 = scmp.ne.s32.totalorder %s377, %s379
      %p386 = scmp.eq.s32.totalorder %s33, 1
      %p387 = por %p385, %p386
      %p388 = scmp.ne.s32.totalorder %s379, %s380
      %p389 = scmp.eq.s32.totalorder %s33, 0
      %p390 = por %p388, %p389
      %p391 = scmp.ne.s32.totalorder %s379, %s380
      %p392 = scmp.eq.s32.totalorder %s34, 1
      %p393 = por %p391, %p392
      %p395 = scmp.ne.s32.totalorder %s380, %s394
      %p396 = scmp.eq.s32.totalorder %s34, 0
      %p397 = por %p395, %p396
      %s398 = ssub.s32 %s28, %s35
      %p399 = scmp.eq.s32.totalorder %s398, 0
      %s401 = sadd.s32 %s400, 1
      %s402 = scalar_select %p399, %s400, %s401
      %p405 = pneg %p399
      %p406 = scmp.eq.s32.totalorder %s28, 1
      %p407 = por %p405, %p406
      %p408 = scmp.ne.s32.totalorder %s400, %s403
      %p409 = scmp.eq.s32.totalorder %s28, 0
      %p410 = por %p408, %p409
      %p411 = scmp.ne.s32.totalorder %s400, %s403
      %p412 = scmp.eq.s32.totalorder %s33, 1
      %p413 = por %p411, %p412
      %p414 = scmp.ne.s32.totalorder %s403, %s404
      %p415 = scmp.eq.s32.totalorder %s33, 0
      %p416 = por %p414, %p415
      %p417 = scmp.ne.s32.totalorder %s403, %s404
      %p418 = scmp.eq.s32.totalorder %s34, 1
      %p419 = por %p417, %p418
      %p421 = scmp.ne.s32.totalorder %s404, %s420
      %p422 = scmp.eq.s32.totalorder %s34, 0
      %p423 = por %p421, %p422
      %p424 = scmp.le.s32.totalorder 1, %s28
      %p425 = scmp.lt.s32.totalorder %s28, 3
      %p426 = pnand %p424, %p425
      %p427 = pneg %p426
      // Predicated region
      $region9: #{tpu_custom_call.1} parent=5 // pred_check
        _
      $region10: #{tpu_custom_call.1} parent=5 // pred_check_branch
        %429 = sbr.rel (%p426) target = $region12
      $region11: #{tpu_custom_call.1} parent=5 // pred_region
        %s430 = ssub.s32 %s28, 1
        // Predicated region
        $region13: #{tpu_custom_call.1} parent=11 // pred_check
          %p431 = pneg %p75
        $region14: #{tpu_custom_call.1} parent=11 // pred_check_branch
          %433 = sbr.rel (%p431) target = $region16
        $region15: #{tpu_custom_call.1} parent=11 // pred_region
          _
        $region16: #{tpu_custom_call.1} parent=11 // pred_fallthru
          _
        // Predicated region
        $region17: #{tpu_custom_call.1} parent=11 // pred_check
          %p434 = pneg %p96
        $region18: #{tpu_custom_call.1} parent=11 // pred_check_branch
          %436 = sbr.rel (%p434) target = $region20
        $region19: #{tpu_custom_call.1} parent=11 // pred_region
          _
        $region20: #{tpu_custom_call.1} parent=11 // pred_fallthru
          _
        // Predicated region
        $region21: #{tpu_custom_call.1} parent=11 // pred_check
          %p437 = pneg %p117
        $region22: #{tpu_custom_call.1} parent=11 // pred_check_branch
          %439 = sbr.rel (%p437) target = $region24
        $region23: #{tpu_custom_call.1} parent=11 // pred_region
          _
        $region24: #{tpu_custom_call.1} parent=11 // pred_fallthru
          _
        // Predicated region
        $region25: #{tpu_custom_call.1} parent=11 // pred_check
          %p440 = pneg %p138
        $region26: #{tpu_custom_call.1} parent=11 // pred_check_branch
          %442 = sbr.rel (%p440) target = $region28
        $region27: #{tpu_custom_call.1} parent=11 // pred_region
          %s444 = ssub.s32 16, 16
          %445 = vsyncadd [#allocation3], %s444
          %s447 = sshll.u32 [#allocation2], 4
          %s448 = int_to_ptr.vmem [resolvable:$true] %s447
          %450 = dma.hbm_to_vmem [thread:$0]  %s4, 16, %s448, [#allocation3]
        $region28: #{tpu_custom_call.1} parent=11 // pred_fallthru
          _
        // Predicated region
        $region29: #{tpu_custom_call.1} parent=11 // pred_check
          %p451 = pneg %p159
        $region30: #{tpu_custom_call.1} parent=11 // pred_check_branch
          %453 = sbr.rel (%p451) target = $region32
        $region31: #{tpu_custom_call.1} parent=11 // pred_region
          _
        $region32: #{tpu_custom_call.1} parent=11 // pred_fallthru
          _
        // Predicated region
        $region33: #{tpu_custom_call.1} parent=11 // pred_check
          %p454 = pneg %p180
        $region34: #{tpu_custom_call.1} parent=11 // pred_check_branch
          %456 = sbr.rel (%p454) target = $region36
        $region35: #{tpu_custom_call.1} parent=11 // pred_region
          %s458 = ssub.s32 16, 16
          %459 = vsyncadd [#allocation6], %s458
          %s461 = sshll.u32 [#allocation5], 4
          %s462 = int_to_ptr.vmem [resolvable:$true] %s461
          %464 = dma.hbm_to_vmem [thread:$0]  %s6, 16, %s462, [#allocation6]
        $region36: #{tpu_custom_call.1} parent=11 // pred_fallthru
          _
        // Predicated region
        $region37: #{tpu_custom_call.1} parent=11 // pred_check
          %p465 = pneg %p201
        $region38: #{tpu_custom_call.1} parent=11 // pred_check_branch
          %467 = sbr.rel (%p465) target = $region40
        $region39: #{tpu_custom_call.1} parent=11 // pred_region
          _
        $region40: #{tpu_custom_call.1} parent=11 // pred_fallthru
          _
        // Predicated region
        $region41: #{tpu_custom_call.1} parent=11 // pred_check
          %p468 = pneg %p222
        $region42: #{tpu_custom_call.1} parent=11 // pred_check_branch
          %470 = sbr.rel (%p468) target = $region44
        $region43: #{tpu_custom_call.1} parent=11 // pred_region
          %s472 = ssub.s32 16, 16
          %473 = vsyncadd [#allocation6], %s472
          %s475 = sshll.u32 [#allocation7], 4
          %s476 = int_to_ptr.vmem [resolvable:$true] %s475
          %478 = dma.hbm_to_vmem [thread:$0]  %s8, 16, %s476, [#allocation6]
        $region44: #{tpu_custom_call.1} parent=11 // pred_fallthru
          _
        // Predicated region
        $region45: #{tpu_custom_call.1} parent=11 // pred_check
          %p479 = pneg %p243
        $region46: #{tpu_custom_call.1} parent=11 // pred_check_branch
          %481 = sbr.rel (%p479) target = $region48
        $region47: #{tpu_custom_call.1} parent=11 // pred_region
          _
        $region48: #{tpu_custom_call.1} parent=11 // pred_fallthru
          _
        // Predicated region
        $region49: #{tpu_custom_call.1} parent=11 // pred_check
          %p482 = pneg %p264
        $region50: #{tpu_custom_call.1} parent=11 // pred_check_branch
          %484 = sbr.rel (%p482) target = $region52
        $region51: #{tpu_custom_call.1} parent=11 // pred_region
          _
        $region52: #{tpu_custom_call.1} parent=11 // pred_fallthru
          _
        // Predicated region
        $region53: #{tpu_custom_call.1} parent=11 // pred_check
          %p485 = pneg %p285
        $region54: #{tpu_custom_call.1} parent=11 // pred_check_branch
          %487 = sbr.rel (%p485) target = $region56
        $region55: #{tpu_custom_call.1} parent=11 // pred_region
          _
        $region56: #{tpu_custom_call.1} parent=11 // pred_fallthru
          _
        // Predicated region
        $region57: #{tpu_custom_call.1} parent=11 // pred_check
          %p488 = pneg %p306
        $region58: #{tpu_custom_call.1} parent=11 // pred_check_branch
          %490 = sbr.rel (%p488) target = $region60
        $region59: #{tpu_custom_call.1} parent=11 // pred_region
          _
        $region60: #{tpu_custom_call.1} parent=11 // pred_fallthru
          _
        // Predicated region
        $region61: #{tpu_custom_call.1} parent=11 // pred_check
          %p491 = pneg %p327
        $region62: #{tpu_custom_call.1} parent=11 // pred_check_branch
          %493 = sbr.rel (%p491) target = $region64
        $region63: #{tpu_custom_call.1} parent=11 // pred_region
          _
        $region64: #{tpu_custom_call.1} parent=11 // pred_fallthru
          _
        // Predicated region
        $region65: #{tpu_custom_call.1} parent=11 // pred_check
          %p494 = pneg %p348
        $region66: #{tpu_custom_call.1} parent=11 // pred_check_branch
          %496 = sbr.rel (%p494) target = $region68
        $region67: #{tpu_custom_call.1} parent=11 // pred_region
          _
        $region68: #{tpu_custom_call.1} parent=11 // pred_fallthru
          _
        // Predicated region
        $region69: #{tpu_custom_call.1} parent=11 // pred_check
          %p497 = pneg %p369
        $region70: #{tpu_custom_call.1} parent=11 // pred_check_branch
          %499 = sbr.rel (%p497) target = $region72
        $region71: #{tpu_custom_call.1} parent=11 // pred_region
          _
        $region72: #{tpu_custom_call.1} parent=11 // pred_fallthru
          _
        // Predicated region
        $region73: #{tpu_custom_call.1} parent=11 // pred_check
          %p500 = pneg %p390
        $region74: #{tpu_custom_call.1} parent=11 // pred_check_branch
          %502 = sbr.rel (%p500) target = $region76
        $region75: #{tpu_custom_call.1} parent=11 // pred_region
          _
        $region76: #{tpu_custom_call.1} parent=11 // pred_fallthru
          _
      $region12: #{tpu_custom_call.1} parent=5 // pred_fallthru
        _
      %p503 = scmp.lt.s32.totalorder %s28, 2
      // Predicated region
      $region77: #{tpu_custom_call.1} parent=5 // pred_check
        %p504 = pneg %p503
      $region78: #{tpu_custom_call.1} parent=5 // pred_check_branch
        %506 = sbr.rel (%p504) target = $region80
      $region79: #{tpu_custom_call.1} parent=5 // pred_region
        // Predicated region
        $region81: #{tpu_custom_call.1} parent=79 // pred_check
          %p507 = pneg %p48
        $region82: #{tpu_custom_call.1} parent=79 // pred_check_branch
          %509 = sbr.rel (%p507) target = $region84
        $region83: #{tpu_custom_call.1} parent=79 // pred_region
          %p510 = scmp.lt.s32.totalorder %s28, 1
          %s511 = scalar_select %p510, %s28, 1
          %s512 = smul.addr %s511, 8
          %s513 = scalar_lea.vmem %s0, %s512
        $region84: #{tpu_custom_call.1} parent=79 // pred_fallthru
          _
      $region80: #{tpu_custom_call.1} parent=5 // pred_fallthru
        _
      %p514 = scmp.le.s32.totalorder 1, %s28
      %p515 = scmp.lt.s32.totalorder %s28, 3
      %p516 = pnand %p514, %p515
      %p517 = pneg %p516
      // Predicated region
      $region85: #{tpu_custom_call.1} parent=5 // pred_check
        _
      $region86: #{tpu_custom_call.1} parent=5 // pred_check_branch
        %519 = sbr.rel (%p516) target = $region88
      $region87: #{tpu_custom_call.1} parent=5 // pred_region
        %s520 = ssub.s32 %s28, 1
        // Predicated region
        $region89: #{tpu_custom_call.1} parent=87 // pred_check
          %p521 = pneg %p138
        $region90: #{tpu_custom_call.1} parent=87 // pred_check_branch
          %523 = sbr.rel (%p521) target = $region92
        $region91: #{tpu_custom_call.1} parent=87 // pred_region
          %524 = dma.done [#allocation3], 16
        $region92: #{tpu_custom_call.1} parent=87 // pred_fallthru
          _
        // Predicated region
        $region93: #{tpu_custom_call.1} parent=87 // pred_check
          %p525 = pneg %p180
        $region94: #{tpu_custom_call.1} parent=87 // pred_check_branch
          %527 = sbr.rel (%p525) target = $region96
        $region95: #{tpu_custom_call.1} parent=87 // pred_region
          %528 = dma.done [#allocation6], 16
        $region96: #{tpu_custom_call.1} parent=87 // pred_fallthru
          _
        // Predicated region
        $region97: #{tpu_custom_call.1} parent=87 // pred_check
          %p529 = pneg %p222
        $region98: #{tpu_custom_call.1} parent=87 // pred_check_branch
          %531 = sbr.rel (%p529) target = $region100
        $region99: #{tpu_custom_call.1} parent=87 // pred_region
          %532 = dma.done [#allocation6], 16
        $region100: #{tpu_custom_call.1} parent=87 // pred_fallthru
          _
        %p533 = scmp.lt.s32.totalorder %s33, 1
        %s534 = scalar_select %p533, %s33, 1
        %s535 = smul.addr %s534, 8
        %s536 = scalar_lea.vmem %s0, %s535
        %p537 = pneg %p54
        %p538 = pneg %p51
        %p539 = pneg %p75
        %p540 = pneg %p72
        %p541 = pneg %p96
        %p542 = pneg %p93
        %p543 = pneg %p117
        %p544 = pneg %p114
        %p545 = pneg %p138
        %p546 = pneg %p135
        %p547 = pneg %p159
        %p548 = pneg %p156
        %p549 = pneg %p180
        %p550 = pneg %p177
        %p551 = pneg %p201
        %p552 = pneg %p198
        %p553 = pneg %p222
        %p554 = pneg %p219
        %p555 = pneg %p243
        %p556 = pneg %p240
        %p557 = pneg %p264
        %p558 = pneg %p261
        %p559 = pneg %p285
        %p560 = pneg %p282
        %p561 = pneg %p306
        %p562 = pneg %p303
        %p563 = pneg %p327
        %p564 = pneg %p324
        %p565 = pneg %p348
        %p566 = pneg %p345
        %p567 = pneg %p369
        %p568 = pneg %p366
        %p569 = pneg %p390
        %p570 = pneg %p387
        %p571 = pneg %p416
        %p572 = pneg %p413
        %s573 = sand.u32 %s403, 1
        %s574 = scalar_lea.sflag [#allocation4], %s573
        %s575 = sand.u32 %s403, 1
        %s576 = smul.addr %s575, 8
        %s577 = scalar_lea.vmem [#allocation8], %s576
        %p578 = scmp.lt.s32.totalorder %s33, 1
        %s579 = scalar_select %p578, %s33, 1
        %s580 = smul.addr %s579, 8
        %s581 = scalar_lea.vmem %s0, %s580
        %v583 = vld [vmem:[%s581] sm:$0xff]
        %v584 = vld [vmem:[%s1] sm:$0x1]
        %v585 = vld [vmem:[%s2] sm:$0x1]
        %vm586 = vcmask 261120
        %v587 = vsel %vm586, %v583, 0.0
        %588 = vadd.xlane.f32.xlu0 %v587
        %v589 = vpop.xlane.xlu0 %588
        %v590 = vrcp.pop 32.0
        %v591 = vmul.f32 %v589, %v590
        %v592 = vsub.f32 %v583, %v591
        %v593 = vmul.f32 %v592, %v592
        %v594 = vsel %vm586, %v593, 0.0
        %595 = vadd.xlane.f32.xlu0 %v594
        %v596 = vpop.xlane.xlu0 %595
        %v597 = vmul.f32 %v596, %v590
        %v598 = vadd.f32 %v597, 1e-05
        %v599 = vrsqrt.pop %v598
        %v600 = vmul.f32 %v592, %v599
        %v602 = vlaneseq
        %v603 = vshrl.u32 %v602, 7
        %v604 = vsub.s32 0, %v603
        %v605 = vrot.slane %v584, %v604
        %v607 = vmul.f32 %v600, %v605
        %v609 = vlaneseq
        %v610 = vshrl.u32 %v609, 7
        %v611 = vsub.s32 0, %v610
        %v612 = vrot.slane %v585, %v611
        %v614 = vadd.f32 %v607, %v612
        %v615 = vpack.c.bf16 %v614, %v614
        %v616 = vld [vmem:[%s3] sm:$0xf]
        %v617 = vld [vmem:[%s3 + $0x4] sm:$0xf]
        %v618 = vld [vmem:[%s3 + $0x8] sm:$0xf]
        %v619 = vld [vmem:[%s3 + $0xc] sm:$0xf]
        %v620 = vld [vmem:[#allocation2] sm:$0x1]
        %v622 = vlaneseq
        %v623 = vshrl.u32 %v622, 7
        %v624 = vsub.s32 0, %v623
        %v625 = vrot.slane %v620, %v624
        %v631 = vunpack.c.l.b16 %v616
        %v632 = vunpack.c.l.b16 %v617
        %v633 = vunpack.c.l.b16 %v618
        %v634 = vunpack.c.l.b16 %v619
        %v635 = vpack.c.b16 %v632, %v631
        %v636 = vpack.c.b16 %v634, %v633
        %v640 = vsel %vm586, %v615, 0
        %642 = vmatprep.subr.bf16.mxu0 0
        %643 = vmatpush1.bf16.msra.mxu0 %v635
        %644 = vmatprep.subr.bf16.mxu0 0
        %645 = vmatpush1.bf16.msra.mxu0 %v636
        %646 = vmatprep.subr.bf16.mxu0 0
        %647 = vmatpush1.bf16.msra.mxu0 0
        %648 = vmatprep.subr.bf16.mxu0 0
        %649 = vmatpush1.bf16.msra.mxu0 0
        %650 = vmatprep.subr.bf16.mxu0 0
        %651 = vmatpush1.bf16.msra.mxu0 0
        %652 = vmatprep.subr.bf16.mxu0 0
        %653 = vmatpush1.bf16.msra.mxu0 0
        %654 = vmatprep.subr.bf16.mxu0 0
        %655 = vmatpush1.bf16.msra.mxu0 0
        %656 = vmatprep.subr.bf16.mxu0 0
        %657 = vmatpush1.bf16.msra.mxu0 0
        %658 = vmatprep.subr.bf16.mxu0 0
        %659 = vmatpush1.bf16.msra.mxu0 0
        %660 = vmatprep.subr.bf16.mxu0 0
        %661 = vmatpush1.bf16.msra.mxu0 0
        %662 = vmatprep.subr.bf16.mxu0 0
        %663 = vmatpush1.bf16.msra.mxu0 0
        %664 = vmatprep.subr.bf16.mxu0 0
        %665 = vmatpush1.bf16.msra.mxu0 0
        %666 = vmatprep.subr.bf16.mxu0 0
        %667 = vmatpush1.bf16.msra.mxu0 0
        %668 = vmatprep.subr.bf16.mxu0 0
        %669 = vmatpush1.bf16.msra.mxu0 0
        %670 = vmatprep.subr.bf16.mxu0 0
        %671 = vmatpush1.bf16.msra.mxu0 0
        %672 = vmatprep.subr.bf16.mxu0 0
        %673 = vmatpush1.bf16.msra.mxu0 0
        %674 = vmatprep.mubr.bf16.mxu0 0
        %675 = vmatmul.mubr.bf16.gmra.mrb[0].mxu0 %v640
        %v676 = vpop.f32.mrb[0].mxu0
        %v677 = vadd.f32 %v625, %v676
        %v678 = vpop.f32.mrb[0].mxu0
        %v679 = vpop.f32.mrb[0].mxu0
        %v680 = vpop.f32.mrb[0].mxu0
        %681 = vdwg.mxu0
        %v682 = vpack.c.bf16 %v677, %v677
        %v683 = vld [vmem:[%s5] sm:$0xf]
        %v684 = vld [vmem:[%s5 + $0x4] sm:$0xf]
        %v685 = vld [vmem:[%s5 + $0x8] sm:$0xf]
        %v686 = vld [vmem:[%s5 + $0xc] sm:$0xf]
        %v687 = vld [vmem:[#allocation5] sm:$0x1]
        %v689 = vlaneseq
        %v690 = vshrl.u32 %v689, 7
        %v691 = vsub.s32 0, %v690
        %v692 = vrot.slane %v687, %v691
        %v698 = vunpack.c.l.b16 %v683
        %v699 = vunpack.c.l.b16 %v684
        %v700 = vunpack.c.l.b16 %v685
        %v701 = vunpack.c.l.b16 %v686
        %v702 = vpack.c.b16 %v699, %v698
        %v703 = vpack.c.b16 %v701, %v700
        %706 = vmatprep.subr.bf16.mxu0 0
        %707 = vmatpush1.bf16.msra.mxu0 %v702
        %708 = vmatprep.subr.bf16.mxu0 0
        %709 = vmatpush1.bf16.msra.mxu0 %v703
        %710 = vmatprep.subr.bf16.mxu0 0
        %711 = vmatpush1.bf16.msra.mxu0 0
        %712 = vmatprep.subr.bf16.mxu0 0
        %713 = vmatpush1.bf16.msra.mxu0 0
        %714 = vmatprep.subr.bf16.mxu0 0
        %715 = vmatpush1.bf16.msra.mxu0 0
        %716 = vmatprep.subr.bf16.mxu0 0
        %717 = vmatpush1.bf16.msra.mxu0 0
        %718 = vmatprep.subr.bf16.mxu0 0
        %719 = vmatpush1.bf16.msra.mxu0 0
        %720 = vmatprep.subr.bf16.mxu0 0
        %721 = vmatpush1.bf16.msra.mxu0 0
        %722 = vmatprep.subr.bf16.mxu0 0
        %723 = vmatpush1.bf16.msra.mxu0 0
        %724 = vmatprep.subr.bf16.mxu0 0
        %725 = vmatpush1.bf16.msra.mxu0 0
        %726 = vmatprep.subr.bf16.mxu0 0
        %727 = vmatpush1.bf16.msra.mxu0 0
        %728 = vmatprep.subr.bf16.mxu0 0
        %729 = vmatpush1.bf16.msra.mxu0 0
        %730 = vmatprep.subr.bf16.mxu0 0
        %731 = vmatpush1.bf16.msra.mxu0 0
        %732 = vmatprep.subr.bf16.mxu0 0
        %733 = vmatpush1.bf16.msra.mxu0 0
        %734 = vmatprep.subr.bf16.mxu0 0
        %735 = vmatpush1.bf16.msra.mxu0 0
        %736 = vmatprep.subr.bf16.mxu0 0
        %737 = vmatpush1.bf16.msra.mxu0 0
        %738 = vmatprep.mubr.bf16.mxu0 0
        %739 = vmatmul.mubr.bf16.gmra.mrb[0].mxu0 %v640
        %v740 = vpop.f32.mrb[0].mxu0
        %v741 = vadd.f32 %v692, %v740
        %v742 = vpop.f32.mrb[0].mxu0
        %v743 = vpop.f32.mrb[0].mxu0
        %v744 = vpop.f32.mrb[0].mxu0
        %745 = vdwg.mxu0
        %v746 = vpack.c.bf16 %v741, %v741
        %v747 = vld [vmem:[%s7] sm:$0xf]
        %v748 = vld [vmem:[%s7 + $0x4] sm:$0xf]
        %v749 = vld [vmem:[%s7 + $0x8] sm:$0xf]
        %v750 = vld [vmem:[%s7 + $0xc] sm:$0xf]
        %v751 = vld [vmem:[#allocation7] sm:$0x1]
        %v753 = vlaneseq
        %v754 = vshrl.u32 %v753, 7
        %v755 = vsub.s32 0, %v754
        %v756 = vrot.slane %v751, %v755
        %v762 = vunpack.c.l.b16 %v747
        %v763 = vunpack.c.l.b16 %v748
        %v764 = vunpack.c.l.b16 %v749
        %v765 = vunpack.c.l.b16 %v750
        %v766 = vpack.c.b16 %v763, %v762
        %v767 = vpack.c.b16 %v765, %v764
        %770 = vmatprep.subr.bf16.mxu0 0
        %771 = vmatpush1.bf16.msra.mxu0 %v766
        %772 = vmatprep.subr.bf16.mxu0 0
        %773 = vmatpush1.bf16.msra.mxu0 %v767
        %774 = vmatprep.subr.bf16.mxu0 0
        %775 = vmatpush1.bf16.msra.mxu0 0
        %776 = vmatprep.subr.bf16.mxu0 0
        %777 = vmatpush1.bf16.msra.mxu0 0
        %778 = vmatprep.subr.bf16.mxu0 0
        %779 = vmatpush1.bf16.msra.mxu0 0
        %780 = vmatprep.subr.bf16.mxu0 0
        %781 = vmatpush1.bf16.msra.mxu0 0
        %782 = vmatprep.subr.bf16.mxu0 0
        %783 = vmatpush1.bf16.msra.mxu0 0
        %784 = vmatprep.subr.bf16.mxu0 0
        %785 = vmatpush1.bf16.msra.mxu0 0
        %786 = vmatprep.subr.bf16.mxu0 0
        %787 = vmatpush1.bf16.msra.mxu0 0
        %788 = vmatprep.subr.bf16.mxu0 0
        %789 = vmatpush1.bf16.msra.mxu0 0
        %790 = vmatprep.subr.bf16.mxu0 0
        %791 = vmatpush1.bf16.msra.mxu0 0
        %792 = vmatprep.subr.bf16.mxu0 0
        %793 = vmatpush1.bf16.msra.mxu0 0
        %794 = vmatprep.subr.bf16.mxu0 0
        %795 = vmatpush1.bf16.msra.mxu0 0
        %796 = vmatprep.subr.bf16.mxu0 0
        %797 = vmatpush1.bf16.msra.mxu0 0
        %798 = vmatprep.subr.bf16.mxu0 0
        %799 = vmatpush1.bf16.msra.mxu0 0
        %800 = vmatprep.subr.bf16.mxu0 0
        %801 = vmatpush1.bf16.msra.mxu0 0
        %802 = vmatprep.mubr.bf16.mxu0 0
        %803 = vmatmul.mubr.bf16.gmra.mrb[0].mxu0 %v640
        %v804 = vpop.f32.mrb[0].mxu0
        %v805 = vadd.f32 %v756, %v804
        %v806 = vpop.f32.mrb[0].mxu0
        %v807 = vpop.f32.mrb[0].mxu0
        %v808 = vpop.f32.mrb[0].mxu0
        %809 = vdwg.mxu0
        %v810 = vpack.c.bf16 %v805, %v805
        %v811 = vlaneseq
        %v812 = vshrl.u32 %v811, 7
        %v813 = vlaneseq
        %v814 = vand.u32 %v813, 127
        %vm815 = vcmp.le.s32.totalorder %v814, %v812
        %v816 = vsel %vm815, 0.0, -1e+30
        %vm817 = vcmask 64512
        %v819 = vsel %vm817, %v682, 0
        %v822 = vsel %vm817, %v746, 0
        %824 = vmatprep.subr.bf16.mxu0 0
        %825 = vmatpush1.bf16.xpose.msra.mxu0 %v822
        %826 = vmatprep.subr.bf16.mxu0 0
        %827 = vmatpush1.bf16.xpose.msra.mxu0 0
        %828 = vmatprep.subr.bf16.mxu0 0
        %829 = vmatpush1.bf16.xpose.msra.mxu0 0
        %830 = vmatprep.subr.bf16.mxu0 0
        %831 = vmatpush1.bf16.xpose.msra.mxu0 0
        %832 = vmatprep.subr.bf16.mxu0 0
        %833 = vmatpush1.bf16.xpose.msra.mxu0 0
        %834 = vmatprep.subr.bf16.mxu0 0
        %835 = vmatpush1.bf16.xpose.msra.mxu0 0
        %836 = vmatprep.subr.bf16.mxu0 0
        %837 = vmatpush1.bf16.xpose.msra.mxu0 0
        %838 = vmatprep.subr.bf16.mxu0 0
        %839 = vmatpush1.bf16.xpose.msra.mxu0 0
        %840 = vmatprep.subr.bf16.mxu0 0
        %841 = vmatpush1.bf16.xpose.msra.mxu0 0
        %842 = vmatprep.subr.bf16.mxu0 0
        %843 = vmatpush1.bf16.xpose.msra.mxu0 0
        %844 = vmatprep.subr.bf16.mxu0 0
        %845 = vmatpush1.bf16.xpose.msra.mxu0 0
        %846 = vmatprep.subr.bf16.mxu0 0
        %847 = vmatpush1.bf16.xpose.msra.mxu0 0
        %848 = vmatprep.subr.bf16.mxu0 0
        %849 = vmatpush1.bf16.xpose.msra.mxu0 0
        %850 = vmatprep.subr.bf16.mxu0 0
        %851 = vmatpush1.bf16.xpose.msra.mxu0 0
        %852 = vmatprep.subr.bf16.mxu0 0
        %853 = vmatpush1.bf16.xpose.msra.mxu0 0
        %854 = vmatprep.subr.bf16.mxu0 0
        %855 = vmatpush1.bf16.xpose.msra.mxu0 0
        %856 = vmatprep.mubr.bf16.mxu0 0
        %857 = vmatmul.mubr.bf16.gmra.mrb[0].mxu0 %v819
        %v858 = vpop.f32.mrb[0].mxu0
        %v859 = vadd.f32 %v816, %v858
        %v860 = vpop.f32.mrb[0].mxu0
        %v861 = vpop.f32.mrb[0].mxu0
        %v862 = vpop.f32.mrb[0].mxu0
        %863 = vdwg.mxu0
        %v864 = vsel %vm817, %v859, -inf
        %865 = vmax.xlane.f32.xlu0 %v864
        %v866 = vpop.xlane.xlu0 %865
        %v867 = vsub.f32 %v859, %v866
        %v868 = vmul.f32 %v867, 1.442695
        %v869 = vpow.pop %v868
        %v870 = vsel %vm817, %v869, 0.0
        %871 = vadd.xlane.f32.xlu0 %v870
        %v872 = vpop.xlane.xlu0 %871
        %v873 = vrcp.pop %v872
        %v874 = vmul.f32 %v869, %v873
        %v875 = vpack.c.bf16 %v874, %v874
        %v877 = vsel %vm817, %v875, 0
        %vm879 = vcmask 1043456
        %v881 = vsel %vm879, %v810, 0
        %883 = vmatprep.subr.bf16.mxu0 0
        %884 = vmatpush1.bf16.msra.mxu0 %v881
        %885 = vmatprep.subr.bf16.mxu0 0
        %886 = vmatpush1.bf16.msra.mxu0 0
        %887 = vmatprep.subr.bf16.mxu0 0
        %888 = vmatpush1.bf16.msra.mxu0 0
        %889 = vmatprep.subr.bf16.mxu0 0
        %890 = vmatpush1.bf16.msra.mxu0 0
        %891 = vmatprep.subr.bf16.mxu0 0
        %892 = vmatpush1.bf16.msra.mxu0 0
        %893 = vmatprep.subr.bf16.mxu0 0
        %894 = vmatpush1.bf16.msra.mxu0 0
        %895 = vmatprep.subr.bf16.mxu0 0
        %896 = vmatpush1.bf16.msra.mxu0 0
        %897 = vmatprep.subr.bf16.mxu0 0
        %898 = vmatpush1.bf16.msra.mxu0 0
        %899 = vmatprep.subr.bf16.mxu0 0
        %900 = vmatpush1.bf16.msra.mxu0 0
        %901 = vmatprep.subr.bf16.mxu0 0
        %902 = vmatpush1.bf16.msra.mxu0 0
        %903 = vmatprep.subr.bf16.mxu0 0
        %904 = vmatpush1.bf16.msra.mxu0 0
        %905 = vmatprep.subr.bf16.mxu0 0
        %906 = vmatpush1.bf16.msra.mxu0 0
        %907 = vmatprep.subr.bf16.mxu0 0
        %908 = vmatpush1.bf16.msra.mxu0 0
        %909 = vmatprep.subr.bf16.mxu0 0
        %910 = vmatpush1.bf16.msra.mxu0 0
        %911 = vmatprep.subr.bf16.mxu0 0
        %912 = vmatpush1.bf16.msra.mxu0 0
        %913 = vmatprep.subr.bf16.mxu0 0
        %914 = vmatpush1.bf16.msra.mxu0 0
        %915 = vmatprep.mubr.bf16.mxu0 0
        %916 = vmatmul.mubr.bf16.gmra.mrb[0].mxu0 %v877
        %v917 = vpop.f32.mrb[0].mxu0
        %v918 = vadd.f32 0.0, %v917
        %v919 = vpop.f32.mrb[0].mxu0
        %v920 = vpop.f32.mrb[0].mxu0
        %v921 = vpop.f32.mrb[0].mxu0
        %922 = vdwg.mxu0
        %924 = vrot.lane.b32.xlu0 %v682, 120
        %v925 = vpop.permute.xlu0 %924
        %927 = vrot.lane.b32.xlu0 %v746, 120
        %v928 = vpop.permute.xlu0 %927
        %v930 = vsel %vm817, %v925, 0
        %v933 = vsel %vm817, %v928, 0
        %935 = vmatprep.subr.bf16.mxu0 0
        %936 = vmatpush1.bf16.xpose.msra.mxu0 %v933
        %937 = vmatprep.subr.bf16.mxu0 0
        %938 = vmatpush1.bf16.xpose.msra.mxu0 0
        %939 = vmatprep.subr.bf16.mxu0 0
        %940 = vmatpush1.bf16.xpose.msra.mxu0 0
        %941 = vmatprep.subr.bf16.mxu0 0
        %942 = vmatpush1.bf16.xpose.msra.mxu0 0
        %943 = vmatprep.subr.bf16.mxu0 0
        %944 = vmatpush1.bf16.xpose.msra.mxu0 0
        %945 = vmatprep.subr.bf16.mxu0 0
        %946 = vmatpush1.bf16.xpose.msra.mxu0 0
        %947 = vmatprep.subr.bf16.mxu0 0
        %948 = vmatpush1.bf16.xpose.msra.mxu0 0
        %949 = vmatprep.subr.bf16.mxu0 0
        %950 = vmatpush1.bf16.xpose.msra.mxu0 0
        %951 = vmatprep.subr.bf16.mxu0 0
        %952 = vmatpush1.bf16.xpose.msra.mxu0 0
        %953 = vmatprep.subr.bf16.mxu0 0
        %954 = vmatpush1.bf16.xpose.msra.mxu0 0
        %955 = vmatprep.subr.bf16.mxu0 0
        %956 = vmatpush1.bf16.xpose.msra.mxu0 0
        %957 = vmatprep.subr.bf16.mxu0 0
        %958 = vmatpush1.bf16.xpose.msra.mxu0 0
        %959 = vmatprep.subr.bf16.mxu0 0
        %960 = vmatpush1.bf16.xpose.msra.mxu0 0
        %961 = vmatprep.subr.bf16.mxu0 0
        %962 = vmatpush1.bf16.xpose.msra.mxu0 0
        %963 = vmatprep.subr.bf16.mxu0 0
        %964 = vmatpush1.bf16.xpose.msra.mxu0 0
        %965 = vmatprep.subr.bf16.mxu0 0
        %966 = vmatpush1.bf16.xpose.msra.mxu0 0
        %967 = vmatprep.mubr.bf16.mxu0 0
        %968 = vmatmul.mubr.bf16.gmra.mrb[0].mxu0 %v930
        %v969 = vpop.f32.mrb[0].mxu0
        %v970 = vadd.f32 %v816, %v969
        %v971 = vpop.f32.mrb[0].mxu0
        %v972 = vpop.f32.mrb[0].mxu0
        %v973 = vpop.f32.mrb[0].mxu0
        %974 = vdwg.mxu0
        %v975 = vsel %vm817, %v970, -inf
        %976 = vmax.xlane.f32.xlu0 %v975
        %v977 = vpop.xlane.xlu0 %976
        %v978 = vsub.f32 %v970, %v977
        %v979 = vmul.f32 %v978, 1.442695
        %v980 = vpow.pop %v979
        %v981 = vsel %vm817, %v980, 0.0
        %982 = vadd.xlane.f32.xlu0 %v981
        %v983 = vpop.xlane.xlu0 %982
        %v984 = vrcp.pop %v983
        %v985 = vmul.f32 %v980, %v984
        %v986 = vpack.c.bf16 %v985, %v985
        %988 = vrot.lane.b32.xlu0 %v810, 120
        %v989 = vpop.permute.xlu0 %988
        %v991 = vsel %vm817, %v986, 0
        %v994 = vsel %vm879, %v989, 0
        %996 = vmatprep.subr.bf16.mxu0 0
        %997 = vmatpush1.bf16.msra.mxu0 %v994
        %998 = vmatprep.subr.bf16.mxu0 0
        %999 = vmatpush1.bf16.msra.mxu0 0
        %1000 = vmatprep.subr.bf16.mxu0 0
        %1001 = vmatpush1.bf16.msra.mxu0 0
        %1002 = vmatprep.subr.bf16.mxu0 0
        %1003 = vmatpush1.bf16.msra.mxu0 0
        %1004 = vmatprep.subr.bf16.mxu0 0
        %1005 = vmatpush1.bf16.msra.mxu0 0
        %1006 = vmatprep.subr.bf16.mxu0 0
        %1007 = vmatpush1.bf16.msra.mxu0 0
        %1008 = vmatprep.subr.bf16.mxu0 0
        %1009 = vmatpush1.bf16.msra.mxu0 0
        %1010 = vmatprep.subr.bf16.mxu0 0
        %1011 = vmatpush1.bf16.msra.mxu0 0
        %1012 = vmatprep.subr.bf16.mxu0 0
        %1013 = vmatpush1.bf16.msra.mxu0 0
        %1014 = vmatprep.subr.bf16.mxu0 0
        %1015 = vmatpush1.bf16.msra.mxu0 0
        %1016 = vmatprep.subr.bf16.mxu0 0
        %1017 = vmatpush1.bf16.msra.mxu0 0
        %1018 = vmatprep.subr.bf16.mxu0 0
        %1019 = vmatpush1.bf16.msra.mxu0 0
        %1020 = vmatprep.subr.bf16.mxu0 0
        %1021 = vmatpush1.bf16.msra.mxu0 0
        %1022 = vmatprep.subr.bf16.mxu0 0
        %1023 = vmatpush1.bf16.msra.mxu0 0
        %1024 = vmatprep.subr.bf16.mxu0 0
        %1025 = vmatpush1.bf16.msra.mxu0 0
        %1026 = vmatprep.subr.bf16.mxu0 0
        %1027 = vmatpush1.bf16.msra.mxu0 0
        %1028 = vmatprep.mubr.bf16.mxu0 0
        %1029 = vmatmul.mubr.bf16.gmra.mrb[0].mxu0 %v991
        %v1030 = vpop.f32.mrb[0].mxu0
        %v1031 = vadd.f32 0.0, %v1030
        %v1032 = vpop.f32.mrb[0].mxu0
        %v1033 = vpop.f32.mrb[0].mxu0
        %v1034 = vpop.f32.mrb[0].mxu0
        %1035 = vdwg.mxu0
        %1036 = vrot.lane.b32.xlu0 %v682, 112
        %v1037 = vpop.permute.xlu0 %1036
        %1038 = vrot.lane.b32.xlu0 %v746, 112
        %v1039 = vpop.permute.xlu0 %1038
        %v1041 = vsel %vm817, %v1037, 0
        %v1044 = vsel %vm817, %v1039, 0
        %1046 = vmatprep.subr.bf16.mxu0 0
        %1047 = vmatpush1.bf16.xpose.msra.mxu0 %v1044
        %1048 = vmatprep.subr.bf16.mxu0 0
        %1049 = vmatpush1.bf16.xpose.msra.mxu0 0
        %1050 = vmatprep.subr.bf16.mxu0 0
        %1051 = vmatpush1.bf16.xpose.msra.mxu0 0
        %1052 = vmatprep.subr.bf16.mxu0 0
        %1053 = vmatpush1.bf16.xpose.msra.mxu0 0
        %1054 = vmatprep.subr.bf16.mxu0 0
        %1055 = vmatpush1.bf16.xpose.msra.mxu0 0
        %1056 = vmatprep.subr.bf16.mxu0 0
        %1057 = vmatpush1.bf16.xpose.msra.mxu0 0
        %1058 = vmatprep.subr.bf16.mxu0 0
        %1059 = vmatpush1.bf16.xpose.msra.mxu0 0
        %1060 = vmatprep.subr.bf16.mxu0 0
        %1061 = vmatpush1.bf16.xpose.msra.mxu0 0
        %1062 = vmatprep.subr.bf16.mxu0 0
        %1063 = vmatpush1.bf16.xpose.msra.mxu0 0
        %1064 = vmatprep.subr.bf16.mxu0 0
        %1065 = vmatpush1.bf16.xpose.msra.mxu0 0
        %1066 = vmatprep.subr.bf16.mxu0 0
        %1067 = vmatpush1.bf16.xpose.msra.mxu0 0
        %1068 = vmatprep.subr.bf16.mxu0 0
        %1069 = vmatpush1.bf16.xpose.msra.mxu0 0
        %1070 = vmatprep.subr.bf16.mxu0 0
        %1071 = vmatpush1.bf16.xpose.msra.mxu0 0
        %1072 = vmatprep.subr.bf16.mxu0 0
        %1073 = vmatpush1.bf16.xpose.msra.mxu0 0
        %1074 = vmatprep.subr.bf16.mxu0 0
        %1075 = vmatpush1.bf16.xpose.msra.mxu0 0
        %1076 = vmatprep.subr.bf16.mxu0 0
        %1077 = vmatpush1.bf16.xpose.msra.mxu0 0
        %1078 = vmatprep.mubr.bf16.mxu0 0
        %1079 = vmatmul.mubr.bf16.gmra.mrb[0].mxu0 %v1041
        %v1080 = vpop.f32.mrb[0].mxu0
        %v1081 = vadd.f32 %v816, %v1080
        %v1082 = vpop.f32.mrb[0].mxu0
        %v1083 = vpop.f32.mrb[0].mxu0
        %v1084 = vpop.f32.mrb[0].mxu0
        %1085 = vdwg.mxu0
        %v1086 = vsel %vm817, %v1081, -inf
        %1087 = vmax.xlane.f32.xlu0 %v1086
        %v1088 = vpop.xlane.xlu0 %1087
        %v1089 = vsub.f32 %v1081, %v1088
        %v1090 = vmul.f32 %v1089, 1.442695
        %v1091 = vpow.pop %v1090
        %v1092 = vsel %vm817, %v1091, 0.0
        %1093 = vadd.xlane.f32.xlu0 %v1092
        %v1094 = vpop.xlane.xlu0 %1093
        %v1095 = vrcp.pop %v1094
        %v1096 = vmul.f32 %v1091, %v1095
        %v1097 = vpack.c.bf16 %v1096, %v1096
        %1098 = vrot.lane.b32.xlu0 %v810, 112
        %v1099 = vpop.permute.xlu0 %1098
        %v1101 = vsel %vm817, %v1097, 0
        %v1104 = vsel %vm879, %v1099, 0
        %1106 = vmatprep.subr.bf16.mxu0 0
        %1107 = vmatpush1.bf16.msra.mxu0 %v1104
        %1108 = vmatprep.subr.bf16.mxu0 0
        %1109 = vmatpush1.bf16.msra.mxu0 0
        %1110 = vmatprep.subr.bf16.mxu0 0
        %1111 = vmatpush1.bf16.msra.mxu0 0
        %1112 = vmatprep.subr.bf16.mxu0 0
        %1113 = vmatpush1.bf16.msra.mxu0 0
        %1114 = vmatprep.subr.bf16.mxu0 0
        %1115 = vmatpush1.bf16.msra.mxu0 0
        %1116 = vmatprep.subr.bf16.mxu0 0
        %1117 = vmatpush1.bf16.msra.mxu0 0
        %1118 = vmatprep.subr.bf16.mxu0 0
        %1119 = vmatpush1.bf16.msra.mxu0 0
        %1120 = vmatprep.subr.bf16.mxu0 0
        %1121 = vmatpush1.bf16.msra.mxu0 0
        %1122 = vmatprep.subr.bf16.mxu0 0
        %1123 = vmatpush1.bf16.msra.mxu0 0
        %1124 = vmatprep.subr.bf16.mxu0 0
        %1125 = vmatpush1.bf16.msra.mxu0 0
        %1126 = vmatprep.subr.bf16.mxu0 0
        %1127 = vmatpush1.bf16.msra.mxu0 0
        %1128 = vmatprep.subr.bf16.mxu0 0
        %1129 = vmatpush1.bf16.msra.mxu0 0
        %1130 = vmatprep.subr.bf16.mxu0 0
        %1131 = vmatpush1.bf16.msra.mxu0 0
        %1132 = vmatprep.subr.bf16.mxu0 0
        %1133 = vmatpush1.bf16.msra.mxu0 0
        %1134 = vmatprep.subr.bf16.mxu0 0
        %1135 = vmatpush1.bf16.msra.mxu0 0
        %1136 = vmatprep.subr.bf16.mxu0 0
        %1137 = vmatpush1.bf16.msra.mxu0 0
        %1138 = vmatprep.mubr.bf16.mxu0 0
        %1139 = vmatmul.mubr.bf16.gmra.mrb[0].mxu0 %v1101
        %v1140 = vpop.f32.mrb[0].mxu0
        %v1141 = vadd.f32 0.0, %v1140
        %v1142 = vpop.f32.mrb[0].mxu0
        %v1143 = vpop.f32.mrb[0].mxu0
        %v1144 = vpop.f32.mrb[0].mxu0
        %1145 = vdwg.mxu0
        %1146 = vrot.lane.b32.xlu0 %v682, 104
        %v1147 = vpop.permute.xlu0 %1146
        %1148 = vrot.lane.b32.xlu0 %v746, 104
        %v1149 = vpop.permute.xlu0 %1148
        %v1151 = vsel %vm817, %v1147, 0
        %v1154 = vsel %vm817, %v1149, 0
        %1156 = vmatprep.subr.bf16.mxu0 0
        %1157 = vmatpush1.bf16.xpose.msra.mxu0 %v1154
        %1158 = vmatprep.subr.bf16.mxu0 0
        %1159 = vmatpush1.bf16.xpose.msra.mxu0 0
        %1160 = vmatprep.subr.bf16.mxu0 0
        %1161 = vmatpush1.bf16.xpose.msra.mxu0 0
        %1162 = vmatprep.subr.bf16.mxu0 0
        %1163 = vmatpush1.bf16.xpose.msra.mxu0 0
        %1164 = vmatprep.subr.bf16.mxu0 0
        %1165 = vmatpush1.bf16.xpose.msra.mxu0 0
        %1166 = vmatprep.subr.bf16.mxu0 0
        %1167 = vmatpush1.bf16.xpose.msra.mxu0 0
        %1168 = vmatprep.subr.bf16.mxu0 0
        %1169 = vmatpush1.bf16.xpose.msra.mxu0 0
        %1170 = vmatprep.subr.bf16.mxu0 0
        %1171 = vmatpush1.bf16.xpose.msra.mxu0 0
        %1172 = vmatprep.subr.bf16.mxu0 0
        %1173 = vmatpush1.bf16.xpose.msra.mxu0 0
        %1174 = vmatprep.subr.bf16.mxu0 0
        %1175 = vmatpush1.bf16.xpose.msra.mxu0 0
        %1176 = vmatprep.subr.bf16.mxu0 0
        %1177 = vmatpush1.bf16.xpose.msra.mxu0 0
        %1178 = vmatprep.subr.bf16.mxu0 0
        %1179 = vmatpush1.bf16.xpose.msra.mxu0 0
        %1180 = vmatprep.subr.bf16.mxu0 0
        %1181 = vmatpush1.bf16.xpose.msra.mxu0 0
        %1182 = vmatprep.subr.bf16.mxu0 0
        %1183 = vmatpush1.bf16.xpose.msra.mxu0 0
        %1184 = vmatprep.subr.bf16.mxu0 0
        %1185 = vmatpush1.bf16.xpose.msra.mxu0 0
        %1186 = vmatprep.subr.bf16.mxu0 0
        %1187 = vmatpush1.bf16.xpose.msra.mxu0 0
        %1188 = vmatprep.mubr.bf16.mxu0 0
        %1189 = vmatmul.mubr.bf16.gmra.mrb[0].mxu0 %v1151
        %v1190 = vpop.f32.mrb[0].mxu0
        %v1191 = vadd.f32 %v816, %v1190
        %v1192 = vpop.f32.mrb[0].mxu0
        %v1193 = vpop.f32.mrb[0].mxu0
        %v1194 = vpop.f32.mrb[0].mxu0
        %1195 = vdwg.mxu0
        %v1196 = vsel %vm817, %v1191, -inf
        %1197 = vmax.xlane.f32.xlu0 %v1196
        %v1198 = vpop.xlane.xlu0 %1197
        %v1199 = vsub.f32 %v1191, %v1198
        %v1200 = vmul.f32 %v1199, 1.442695
        %v1201 = vpow.pop %v1200
        %v1202 = vsel %vm817, %v1201, 0.0
        %1203 = vadd.xlane.f32.xlu0 %v1202
        %v1204 = vpop.xlane.xlu0 %1203
        %v1205 = vrcp.pop %v1204
        %v1206 = vmul.f32 %v1201, %v1205
        %v1207 = vpack.c.bf16 %v1206, %v1206
        %1208 = vrot.lane.b32.xlu0 %v810, 104
        %v1209 = vpop.permute.xlu0 %1208
        %v1211 = vsel %vm817, %v1207, 0
        %v1214 = vsel %vm879, %v1209, 0
        %1216 = vmatprep.subr.bf16.mxu0 0
        %1217 = vmatpush1.bf16.msra.mxu0 %v1214
        %1218 = vmatprep.subr.bf16.mxu0 0
        %1219 = vmatpush1.bf16.msra.mxu0 0
        %1220 = vmatprep.subr.bf16.mxu0 0
        %1221 = vmatpush1.bf16.msra.mxu0 0
        %1222 = vmatprep.subr.bf16.mxu0 0
        %1223 = vmatpush1.bf16.msra.mxu0 0
        %1224 = vmatprep.subr.bf16.mxu0 0
        %1225 = vmatpush1.bf16.msra.mxu0 0
        %1226 = vmatprep.subr.bf16.mxu0 0
        %1227 = vmatpush1.bf16.msra.mxu0 0
        %1228 = vmatprep.subr.bf16.mxu0 0
        %1229 = vmatpush1.bf16.msra.mxu0 0
        %1230 = vmatprep.subr.bf16.mxu0 0
        %1231 = vmatpush1.bf16.msra.mxu0 0
        %1232 = vmatprep.subr.bf16.mxu0 0
        %1233 = vmatpush1.bf16.msra.mxu0 0
        %1234 = vmatprep.subr.bf16.mxu0 0
        %1235 = vmatpush1.bf16.msra.mxu0 0
        %1236 = vmatprep.subr.bf16.mxu0 0
        %1237 = vmatpush1.bf16.msra.mxu0 0
        %1238 = vmatprep.subr.bf16.mxu0 0
        %1239 = vmatpush1.bf16.msra.mxu0 0
        %1240 = vmatprep.subr.bf16.mxu0 0
        %1241 = vmatpush1.bf16.msra.mxu0 0
        %1242 = vmatprep.subr.bf16.mxu0 0
        %1243 = vmatpush1.bf16.msra.mxu0 0
        %1244 = vmatprep.subr.bf16.mxu0 0
        %1245 = vmatpush1.bf16.msra.mxu0 0
        %1246 = vmatprep.subr.bf16.mxu0 0
        %1247 = vmatpush1.bf16.msra.mxu0 0
        %1248 = vmatprep.mubr.bf16.mxu0 0
        %1249 = vmatmul.mubr.bf16.gmra.mrb[0].mxu0 %v1211
        %v1250 = vpop.f32.mrb[0].mxu0
        %v1251 = vadd.f32 0.0, %v1250
        %v1252 = vpop.f32.mrb[0].mxu0
        %v1253 = vpop.f32.mrb[0].mxu0
        %v1254 = vpop.f32.mrb[0].mxu0
        %1255 = vdwg.mxu0
        %1257 = vrot.lane.b32.xlu0 %v1031, 8
        %v1258 = vpop.permute.xlu0 %1257
        %1261 = vrot.lane.b32.xlu0 %v1141, 16
        %v1262 = vpop.permute.xlu0 %1261
        %1265 = vrot.lane.b32.xlu0 %v1251, 24
        %v1266 = vpop.permute.xlu0 %1265
        %v1268 = vsel %vm817, %v918, %v1258
        %vm1269 = vcmask 130048
        %v1270 = vsel %vm1269, %v1268, %v1262
        %vm1271 = vcmask 195584
        %v1272 = vsel %vm1271, %v1270, %v1266
        %v1273 = vpack.c.bf16 %v1272, %v1272
        %v1274 = vld [vmem:[%s9] sm:$0xf]
        %v1275 = vld [vmem:[%s9 + $0x4] sm:$0xf]
        %v1276 = vld [vmem:[%s9 + $0x8] sm:$0xf]
        %v1277 = vld [vmem:[%s9 + $0xc] sm:$0xf]
        %v1278 = vld [vmem:[%s10] sm:$0x1]
        %v1280 = vlaneseq
        %v1281 = vshrl.u32 %v1280, 7
        %v1282 = vsub.s32 0, %v1281
        %v1283 = vrot.slane %v1278, %v1282
        %v1289 = vunpack.c.l.b16 %v1274
        %v1290 = vunpack.c.l.b16 %v1275
        %v1291 = vunpack.c.l.b16 %v1276
        %v1292 = vunpack.c.l.b16 %v1277
        %v1293 = vpack.c.b16 %v1290, %v1289
        %v1294 = vpack.c.b16 %v1292, %v1291
        %v1298 = vsel %vm586, %v1273, 0
        %1300 = vmatprep.subr.bf16.mxu0 0
        %1301 = vmatpush1.bf16.msra.mxu0 %v1293
        %1302 = vmatprep.subr.bf16.mxu0 0
        %1303 = vmatpush1.bf16.msra.mxu0 %v1294
        %1304 = vmatprep.subr.bf16.mxu0 0
        %1305 = vmatpush1.bf16.msra.mxu0 0
        %1306 = vmatprep.subr.bf16.mxu0 0
        %1307 = vmatpush1.bf16.msra.mxu0 0
        %1308 = vmatprep.subr.bf16.mxu0 0
        %1309 = vmatpush1.bf16.msra.mxu0 0
        %1310 = vmatprep.subr.bf16.mxu0 0
        %1311 = vmatpush1.bf16.msra.mxu0 0
        %1312 = vmatprep.subr.bf16.mxu0 0
        %1313 = vmatpush1.bf16.msra.mxu0 0
        %1314 = vmatprep.subr.bf16.mxu0 0
        %1315 = vmatpush1.bf16.msra.mxu0 0
        %1316 = vmatprep.subr.bf16.mxu0 0
        %1317 = vmatpush1.bf16.msra.mxu0 0
        %1318 = vmatprep.subr.bf16.mxu0 0
        %1319 = vmatpush1.bf16.msra.mxu0 0
        %1320 = vmatprep.subr.bf16.mxu0 0
        %1321 = vmatpush1.bf16.msra.mxu0 0
        %1322 = vmatprep.subr.bf16.mxu0 0
        %1323 = vmatpush1.bf16.msra.mxu0 0
        %1324 = vmatprep.subr.bf16.mxu0 0
        %1325 = vmatpush1.bf16.msra.mxu0 0
        %1326 = vmatprep.subr.bf16.mxu0 0
        %1327 = vmatpush1.bf16.msra.mxu0 0
        %1328 = vmatprep.subr.bf16.mxu0 0
        %1329 = vmatpush1.bf16.msra.mxu0 0
        %1330 = vmatprep.subr.bf16.mxu0 0
        %1331 = vmatpush1.bf16.msra.mxu0 0
        %1332 = vmatprep.mubr.bf16.mxu0 0
        %1333 = vmatmul.mubr.bf16.gmra.mrb[0].mxu0 %v1298
        %v1334 = vpop.f32.mrb[0].mxu0
        %v1335 = vadd.f32 %v1283, %v1334
        %v1336 = vpop.f32.mrb[0].mxu0
        %v1337 = vpop.f32.mrb[0].mxu0
        %v1338 = vpop.f32.mrb[0].mxu0
        %1339 = vdwg.mxu0
        %v1340 = vadd.f32 %v583, %v1335
        %v1341 = vld [vmem:[%s11] sm:$0x1]
        %v1342 = vld [vmem:[%s12] sm:$0x1]
        %v1343 = vsel %vm586, %v1340, 0.0
        %1344 = vadd.xlane.f32.xlu0 %v1343
        %v1345 = vpop.xlane.xlu0 %1344
        %v1346 = vmul.f32 %v1345, %v590
        %v1347 = vsub.f32 %v1340, %v1346
        %v1348 = vmul.f32 %v1347, %v1347
        %v1349 = vsel %vm586, %v1348, 0.0
        %1350 = vadd.xlane.f32.xlu0 %v1349
        %v1351 = vpop.xlane.xlu0 %1350
        %v1352 = vmul.f32 %v1351, %v590
        %v1353 = vadd.f32 %v1352, 1e-05
        %v1354 = vrsqrt.pop %v1353
        %v1355 = vmul.f32 %v1347, %v1354
        %v1357 = vlaneseq
        %v1358 = vshrl.u32 %v1357, 7
        %v1359 = vsub.s32 0, %v1358
        %v1360 = vrot.slane %v1341, %v1359
        %v1362 = vmul.f32 %v1355, %v1360
        %v1364 = vlaneseq
        %v1365 = vshrl.u32 %v1364, 7
        %v1366 = vsub.s32 0, %v1365
        %v1367 = vrot.slane %v1342, %v1366
        %v1369 = vadd.f32 %v1362, %v1367
        %v1370 = vpack.c.bf16 %v1369, %v1369
        %v1371 = vld [vmem:[%s13] sm:$0xf]
        %v1372 = vld [vmem:[%s13 + $0x4] sm:$0xf]
        %v1373 = vld [vmem:[%s13 + $0x8] sm:$0xf]
        %v1374 = vld [vmem:[%s13 + $0xc] sm:$0xf]
        %v1375 = vld [vmem:[%s14] sm:$0x1]
        %v1377 = vlaneseq
        %v1378 = vshrl.u32 %v1377, 7
        %v1379 = vsub.s32 0, %v1378
        %v1380 = vrot.slane %v1375, %v1379
        %v1386 = vunpack.c.l.b16 %v1371
        %v1387 = vunpack.c.l.b16 %v1372
        %v1388 = vunpack.c.l.b16 %v1373
        %v1389 = vunpack.c.l.b16 %v1374
        %v1390 = vpack.c.b16 %v1387, %v1386
        %v1391 = vpack.c.b16 %v1389, %v1388
        %v1395 = vsel %vm586, %v1370, 0
        %1397 = vmatprep.subr.bf16.mxu0 0
        %1398 = vmatpush1.bf16.msra.mxu0 %v1390
        %1399 = vmatprep.subr.bf16.mxu0 0
        %1400 = vmatpush1.bf16.msra.mxu0 %v1391
        %1401 = vmatprep.subr.bf16.mxu0 0
        %1402 = vmatpush1.bf16.msra.mxu0 0
        %1403 = vmatprep.subr.bf16.mxu0 0
        %1404 = vmatpush1.bf16.msra.mxu0 0
        %1405 = vmatprep.subr.bf16.mxu0 0
        %1406 = vmatpush1.bf16.msra.mxu0 0
        %1407 = vmatprep.subr.bf16.mxu0 0
        %1408 = vmatpush1.bf16.msra.mxu0 0
        %1409 = vmatprep.subr.bf16.mxu0 0
        %1410 = vmatpush1.bf16.msra.mxu0 0
        %1411 = vmatprep.subr.bf16.mxu0 0
        %1412 = vmatpush1.bf16.msra.mxu0 0
        %1413 = vmatprep.subr.bf16.mxu0 0
        %1414 = vmatpush1.bf16.msra.mxu0 0
        %1415 = vmatprep.subr.bf16.mxu0 0
        %1416 = vmatpush1.bf16.msra.mxu0 0
        %1417 = vmatprep.subr.bf16.mxu0 0
        %1418 = vmatpush1.bf16.msra.mxu0 0
        %1419 = vmatprep.subr.bf16.mxu0 0
        %1420 = vmatpush1.bf16.msra.mxu0 0
        %1421 = vmatprep.subr.bf16.mxu0 0
        %1422 = vmatpush1.bf16.msra.mxu0 0
        %1423 = vmatprep.subr.bf16.mxu0 0
        %1424 = vmatpush1.bf16.msra.mxu0 0
        %1425 = vmatprep.subr.bf16.mxu0 0
        %1426 = vmatpush1.bf16.msra.mxu0 0
        %1427 = vmatprep.subr.bf16.mxu0 0
        %1428 = vmatpush1.bf16.msra.mxu0 0
        %1429 = vmatprep.mubr.bf16.mxu0 0
        %1430 = vmatmul.mubr.bf16.gmra.mrb[0].mxu0 %v1395
        %v1431 = vpop.f32.mrb[0].mxu0
        %v1432 = vadd.f32 %v1380, %v1431
        %v1433 = vpop.f32.mrb[0].mxu0
        %v1434 = vpop.f32.mrb[0].mxu0
        %v1435 = vpop.f32.mrb[0].mxu0
        %1436 = vdwg.mxu0
        %v1437 = vmul.f32 %v1432, 0.5
        %v1438 = vmul.f32 %v1432, 0.044715
        %v1439 = vmul.f32 %v1438, %v1432
        %v1440 = vmul.f32 %v1439, %v1432
        %v1441 = vadd.f32 %v1432, %v1440
        %v1442 = vmul.f32 %v1441, 0.7978846
        %v1443 = vtanh.pop %v1442
        %v1444 = vadd.f32 %v1443, 1.0
        %v1445 = vmul.f32 %v1437, %v1444
        %v1446 = vpack.c.bf16 %v1445, %v1445
        %v1447 = vld [vmem:[%s15] sm:$0xf]
        %v1448 = vld [vmem:[%s15 + $0x4] sm:$0xf]
        %v1449 = vld [vmem:[%s15 + $0x8] sm:$0xf]
        %v1450 = vld [vmem:[%s15 + $0xc] sm:$0xf]
        %v1451 = vld [vmem:[%s15 + $0x10] sm:$0xf]
        %v1452 = vld [vmem:[%s15 + $0x14] sm:$0xf]
        %v1453 = vld [vmem:[%s15 + $0x18] sm:$0xf]
        %v1454 = vld [vmem:[%s15 + $0x1c] sm:$0xf]
        %v1455 = vld [vmem:[%s15 + $0x20] sm:$0xf]
        %v1456 = vld [vmem:[%s15 + $0x24] sm:$0xf]
        %v1457 = vld [vmem:[%s15 + $0x28] sm:$0xf]
        %v1458 = vld [vmem:[%s15 + $0x2c] sm:$0xf]
        %v1459 = vld [vmem:[%s15 + $0x30] sm:$0xf]
        %v1460 = vld [vmem:[%s15 + $0x34] sm:$0xf]
        %v1461 = vld [vmem:[%s15 + $0x38] sm:$0xf]
        %v1462 = vld [vmem:[%s15 + $0x3c] sm:$0xf]
        %v1463 = vld [vmem:[%s16] sm:$0x1]
        %v1465 = vlaneseq
        %v1466 = vshrl.u32 %v1465, 7
        %v1467 = vsub.s32 0, %v1466
        %v1468 = vrot.slane %v1463, %v1467
        %v1486 = vunpack.c.l.b16 %v1447
        %v1487 = vunpack.c.l.b16 %v1448
        %v1488 = vunpack.c.l.b16 %v1449
        %v1489 = vunpack.c.l.b16 %v1450
        %v1490 = vunpack.c.l.b16 %v1451
        %v1491 = vunpack.c.l.b16 %v1452
        %v1492 = vunpack.c.l.b16 %v1453
        %v1493 = vunpack.c.l.b16 %v1454
        %v1494 = vunpack.c.l.b16 %v1455
        %v1495 = vunpack.c.l.b16 %v1456
        %v1496 = vunpack.c.l.b16 %v1457
        %v1497 = vunpack.c.l.b16 %v1458
        %v1498 = vunpack.c.l.b16 %v1459
        %v1499 = vunpack.c.l.b16 %v1460
        %v1500 = vunpack.c.l.b16 %v1461
        %v1501 = vunpack.c.l.b16 %v1462
        %v1502 = vpack.c.b16 %v1487, %v1486
        %v1503 = vpack.c.b16 %v1489, %v1488
        %v1504 = vpack.c.b16 %v1491, %v1490
        %v1505 = vpack.c.b16 %v1493, %v1492
        %v1506 = vpack.c.b16 %v1495, %v1494
        %v1507 = vpack.c.b16 %v1497, %v1496
        %v1508 = vpack.c.b16 %v1499, %v1498
        %v1509 = vpack.c.b16 %v1501, %v1500
        %1518 = vmatprep.subr.bf16.mxu0 0
        %1519 = vmatpush1.bf16.msra.mxu0 %v1502
        %1520 = vmatprep.subr.bf16.mxu0 0
        %1521 = vmatpush1.bf16.msra.mxu0 %v1503
        %1522 = vmatprep.subr.bf16.mxu0 0
        %1523 = vmatpush1.bf16.msra.mxu0 %v1504
        %1524 = vmatprep.subr.bf16.mxu0 0
        %1525 = vmatpush1.bf16.msra.mxu0 %v1505
        %1526 = vmatprep.subr.bf16.mxu0 0
        %1527 = vmatpush1.bf16.msra.mxu0 %v1506
        %1528 = vmatprep.subr.bf16.mxu0 0
        %1529 = vmatpush1.bf16.msra.mxu0 %v1507
        %1530 = vmatprep.subr.bf16.mxu0 0
        %1531 = vmatpush1.bf16.msra.mxu0 %v1508
        %1532 = vmatprep.subr.bf16.mxu0 0
        %1533 = vmatpush1.bf16.msra.mxu0 %v1509
        %1534 = vmatprep.subr.bf16.mxu0 0
        %1535 = vmatpush1.bf16.msra.mxu0 0
        %1536 = vmatprep.subr.bf16.mxu0 0
        %1537 = vmatpush1.bf16.msra.mxu0 0
        %1538 = vmatprep.subr.bf16.mxu0 0
        %1539 = vmatpush1.bf16.msra.mxu0 0
        %1540 = vmatprep.subr.bf16.mxu0 0
        %1541 = vmatpush1.bf16.msra.mxu0 0
        %1542 = vmatprep.subr.bf16.mxu0 0
        %1543 = vmatpush1.bf16.msra.mxu0 0
        %1544 = vmatprep.subr.bf16.mxu0 0
        %1545 = vmatpush1.bf16.msra.mxu0 0
        %1546 = vmatprep.subr.bf16.mxu0 0
        %1547 = vmatpush1.bf16.msra.mxu0 0
        %1548 = vmatprep.subr.bf16.mxu0 0
        %1549 = vmatpush1.bf16.msra.mxu0 0
        %1550 = vmatprep.mubr.bf16.mxu0 0
        %1551 = vmatmul.mubr.bf16.gmra.mrb[0].mxu0 %v1446
        %v1552 = vpop.f32.mrb[0].mxu0
        %v1553 = vadd.f32 %v1468, %v1552
        %v1554 = vpop.f32.mrb[0].mxu0
        %v1555 = vpop.f32.mrb[0].mxu0
        %v1556 = vpop.f32.mrb[0].mxu0
        %1557 = vdwg.mxu0
        %v1558 = vadd.f32 %v1340, %v1553
        %1559 = vst.msk [vmem:[%s577] sm:$0xff] %vm586, %v1558
        %s1560 = sand.u32 %s403, 1
        %s1561 = scalar_lea.sflag [#allocation4], %s1560
        %s1562 = sand.u32 %s403, 1
        %s1563 = smul.addr %s1562, 8
        %s1564 = scalar_lea.vmem [#allocation8], %s1563
        // Predicated region
        $region101: #{tpu_custom_call.1} parent=87 // pred_check
          %p1565 = pneg %p413
        $region102: #{tpu_custom_call.1} parent=87 // pred_check_branch
          %1567 = sbr.rel (%p1565) target = $region104
        $region103: #{tpu_custom_call.1} parent=87 // pred_region
          %s1569 = ssub.s32 128, 128
          %1570 = vsyncadd %s1561, %s1569
          %s1571 = smul.addr %s33, 128
          %s1572 = scalar_lea.hbm %s17, %s1571
          %s1574 = sshll.u32 %s1564, 4
          %s1575 = int_to_ptr.vmem [resolvable:$true] %s1574
          %1577 = dma.vmem_to_hbm [thread:$0]  %s1575, 128, %s1572, %s1561
        $region104: #{tpu_custom_call.1} parent=87 // pred_fallthru
          _
      $region88: #{tpu_custom_call.1} parent=5 // pred_fallthru
        _
      %p1578 = scmp.le.s32.totalorder 2, %s28
      // Predicated region
      $region105: #{tpu_custom_call.1} parent=5 // pred_check
        %p1579 = pneg %p1578
      $region106: #{tpu_custom_call.1} parent=5 // pred_check_branch
        %1581 = sbr.rel (%p1579) target = $region108
      $region107: #{tpu_custom_call.1} parent=5 // pred_region
        %s1582 = ssub.s32 %s28, 2
        // Predicated region
        $region109: #{tpu_custom_call.1} parent=107 // pred_check
          %p1583 = pneg %p419
        $region110: #{tpu_custom_call.1} parent=107 // pred_check_branch
          %1585 = sbr.rel (%p1583) target = $region112
        $region111: #{tpu_custom_call.1} parent=107 // pred_region
          %s1586 = sand.u32 %s404, 1
          %s1587 = scalar_lea.sflag [#allocation4], %s1586
          %s1588 = sand.u32 %s404, 1
          %s1589 = smul.addr %s1588, 8
          %s1590 = scalar_lea.vmem [#allocation8], %s1589
          %1591 = dma.done %s1587, 128
        $region112: #{tpu_custom_call.1} parent=107 // pred_fallthru
          _
      $region108: #{tpu_custom_call.1} parent=5 // pred_fallthru
        _
    $region6: #{tpu_custom_call.1} parent=1 // loop_footer
      %s32 = sadd.s32 1, %s28
    $region7: #{tpu_custom_call.1} parent=1 // loop_footer_branch
      %27 = sbr.rel target = $region3
    $region8: #{tpu_custom_call.1} parent=1 // loop_exit
      _
    %1592 = vsyncpa [#allocation3], 1
    %s1593 = scalar_lea.sflag [#allocation3], 1
    %1594 = vsyncpa %s1593, 1
    %1595 = vsyncpa [#allocation6], 1
    %1596 = vsyncpa [#allocation4], 1
    %s1597 = scalar_lea.sflag [#allocation4], 1
    %1598 = vsyncpa %s1597, 1

</llo_original>
